<compile_context>
chip_gen: v7x
topology: tpu7x:2x2x1
jax: 0.10.0
libtpu: 0.0.40
codegen_flags: <defaults>
</compile_context>

<pallas_src>
import math

import jax
import jax.numpy as jnp
from jax import lax
from jax.experimental import pallas as pl
from jax.experimental.pallas import tpu as pltpu


def _round_up(x, m):
    return ((x + m - 1) // m) * m


def _vmem_budget_bytes():
    """Physical VMEM of this generation minus headroom for compiler scratch."""
    cap = 64 * 1024 * 1024                      # safe fallback (v7x-sized)
    try:
        info = pltpu.get_tpu_info()
        cap = int(getattr(info, "vmem_capacity_bytes", cap))
    except Exception:
        pass
    return max(cap - 8 * 1024 * 1024, 16 * 1024 * 1024)


# ---------------------------------------------------------------------------
# Pallas kernel: 3x3 / stride-1 / pad-1 conv for a block of Bblk NHWC images.
#
# Scratch layout (compute dtype, VMEM):
#   xs[b*S + hp*Wp + wp, kx*Cin:(kx+1)*Cin] = padded_img_b[hp, wp + kx, :]
# with Wp = round_up(W+2, 8) and S = (H+2)*Wp, so the conv becomes 3 matmuls
# (one per ky) of shape (Bblk*S, 3*Cin) x (3*Cin, Cout), each starting at the
# sublane-aligned row offset ky*Wp.  Output row q = b*S + h*Wp + w; rows with
# w >= W or h >= H are junk and are never gathered by the nearest upsample.
# ---------------------------------------------------------------------------
def _make_conv_kernel(H, W, Cin, Cout, Bblk, n_chunks, compute_dtype):
    Wp = _round_up(W + 2, 8)
    S = (H + 2) * Wp
    M = Bblk * S

    def kernel(*refs):
        chunk_refs = refs[:n_chunks]
        w_ref, b_ref, o_ref, xs_ref = refs[n_chunks:]

        # ---- build padded, kx-lane-concatenated activation in VMEM ----------
        xs_ref[...] = jnp.zeros_like(xs_ref)          # halo rows / junk columns
        for b in range(Bblk):
            for h in range(H):
                parts = [c_ref[b, h * W:(h + 1) * W, :] for c_ref in chunk_refs]
                row = parts[0] if n_chunks == 1 else jnp.concatenate(parts, axis=1)
                row = row.astype(compute_dtype)                     # (W, Cin)
                base = b * S + (h + 1) * Wp
                xs_ref[base + 1: base + 1 + W, 0:Cin] = row         # kx = 0
                xs_ref[base: base + W, Cin:2 * Cin] = row           # kx = 1
                if W > 1:
                    xs_ref[base: base + W - 1, 2 * Cin:3 * Cin] = row[1:, :]  # kx = 2

        # ---- 3 MXU matmuls (one per ky), K = 3*Cin, f32 accumulation ---------
        acc = jnp.zeros((M, Cout), jnp.float32)
        for ky in range(3):
            acc = acc + jnp.dot(xs_ref[ky * Wp: ky * Wp + M, :], w_ref[ky],
                                preferred_element_type=jnp.float32)
        o_ref[...] = (acc + b_ref[...]).astype(o_ref.dtype)

    return kernel, Wp, S, M


def conv3x3_same_nhwc(chunks, w_proj, b_proj, H, W, compute_dtype=jnp.bfloat16):
    """3x3, stride 1, padding 1 conv over channel-chunked (B, H*W, Cc) inputs.

    Returns (B, H+2, Wp, Cout) float32; rows >= H and columns >= W are junk."""
    B = int(chunks[0].shape[0])
    HW = int(chunks[0].shape[1])
    assert HW == H * W
    chunk_channels = [int(c.shape[2]) for c in chunks]
    Cin = sum(chunk_channels)
    Cout = int(w_proj.shape[0])
    csize = jnp.dtype(compute_dtype).itemsize

    Wp = _round_up(W + 2, 8)
    S = (H + 2) * Wp

    # ---- pick how many images share one grid step (fills the MXU M dim) ------
    budget = _vmem_budget_bytes()
    fixed = (2 * 3 * (3 * Cin) * Cout * csize       # weights (double-buffered)
             + 2 * Cout * 4                         # bias
             + 2 * Wp * (3 * Cin) * csize)          # scratch tail rows
    per_img = (2 * HW * Cin * csize                 # input chunks (double-buffered)
               + 2 * S * Cout * 4                   # f32 output (double-buffered)
               + S * (3 * Cin) * csize              # scratch
               + S * Cout * 4)                      # accumulator
    target_rows = 1024                              # M beyond ~1k rows: diminishing returns
    bblk = 1
    for d in range(1, B + 1):
        if B % d:
            continue
        if B >= 2 and d == B:
            continue                                # keep >= 2 grid steps (megacore / v7x)
        if d * S > max(S, target_rows):
            continue
        if fixed + d * per_img > budget:
            continue
        bblk = d
    nsteps = B // bblk

    kernel, Wp, S, M = _make_conv_kernel(H, W, Cin, Cout, bblk, len(chunks),
                                         compute_dtype)

    chunks = [c.astype(compute_dtype) for c in chunks]
    # (Cout, Cin, 3, 3) -> (ky, kx, Cin, Cout) -> (ky, kx*Cin, Cout): rows of each
    # (3*Cin, Cout) weight slab match the kx-lane-concatenated operand layout.
    w_k = jnp.transpose(w_proj, (2, 3, 1, 0)).reshape(3, 3 * Cin, Cout)
    w_k = w_k.astype(compute_dtype)
    b2 = b_proj.reshape(1, Cout).astype(jnp.float32)

    need = fixed + bblk * per_img
    vmem_limit = int(min(max(2 * need, 32 * 1024 * 1024), budget))

    in_specs = (
        [pl.BlockSpec((bblk, HW, c), lambda s: (s, 0, 0)) for c in chunk_channels]
        + [pl.BlockSpec((3, 3 * Cin, Cout), lambda s: (0, 0, 0)),   # resident weights
           pl.BlockSpec((1, Cout), lambda s: (0, 0))])              # bias

    y = pl.pallas_call(
        kernel,
        out_shape=jax.ShapeDtypeStruct((nsteps, M, Cout), jnp.float32),
        grid=(nsteps,),
        in_specs=in_specs,
        out_specs=pl.BlockSpec((None, M, Cout), lambda s: (s, 0, 0)),
        scratch_shapes=[pltpu.VMEM((M + 2 * Wp, 3 * Cin), compute_dtype)],
        compiler_params=pltpu.CompilerParams(
            dimension_semantics=("parallel",),
            vmem_limit_bytes=vmem_limit),
    )(*chunks, w_k, b2)

    return y.reshape(B, H + 2, Wp, Cout)


# ---------------------------------------------------------------------------
# Full PatchEmbed_event forward.
#   x:      (B, L, D) float32  (== PyTorch (batch, num_events, feat_dim))
#   w_pos:  (128, 3, 1), b_pos: (128,)                Conv1d weights
#   w_proj: (embed_dim, in_chans, 3, 3), b_proj: (embed_dim,)
# Returns (B, 56, 56, embed_dim) float32 == PyTorch output after permute(0,2,3,1).
# ---------------------------------------------------------------------------
def patch_embed_event(x, w_pos, b_pos, w_proj, b_proj, in_chans=256,
                      compute_dtype=jnp.bfloat16, out_size=56):
    x = x.astype(jnp.float32)
    B, L, D = x.shape

    # pos_embedding: Conv1d(3 -> 128, k=1) + ReLU.  K=3 contraction -> VPU math.
    w_pos_mat = jnp.transpose(w_pos[:, :, 0], (1, 0))                     # (3, 128)
    pos = jnp.einsum('bld,dn->bln', x[:, :, :3], w_pos_mat,
                     precision=lax.Precision.HIGHEST) + b_pos
    pos = jnp.maximum(pos, 0.0)                                           # (B, L, 128)

    Nc = pos.shape[-1] + (D - 3)
    hw2 = (Nc * L) // in_chans
    H = W = math.isqrt(hw2)
    if H * W * in_chans != Nc * L:
        raise ValueError(
            f"PatchEmbed_event: channels*length ({Nc}*{L}) is not a perfect-square "
            f"multiple of in_chans={in_chans}")

    if Nc == in_chans:
        # (B, Nc, L) -> (B, in_chans, H, W) -> NHWC collapses to a pure reshape,
        # and the channel concat is resolved inside the kernel: no HBM concat, no
        # transpose, no padding pass over the activation.
        chunks = [pos]
        if D > 3:
            chunks.append(x[:, :, 3:])
    else:
        cat = jnp.concatenate([pos, x[:, :, 3:]], axis=-1)                # (B, L, Nc)
        cat = jnp.transpose(cat, (0, 2, 1)).reshape(B, in_chans, H, W)    # NCHW
        chunks = [jnp.transpose(cat, (0, 2, 3, 1)).reshape(B, H * W, in_chans)]

    # proj: Conv2d(in_chans -> embed_dim, k=3, s=1, p=1) -- Pallas direct conv.
    y_pad = conv3x3_same_nhwc(chunks, w_proj, b_proj, H, W,
                              compute_dtype=compute_dtype)                # (B,H+2,Wp,E)

    # F.interpolate(size=(56,56), mode='nearest'): src = dst*in // out.
    # The gather also drops the aligned-width junk columns and junk rows.
    # TODO(synk): fuse this gather into the kernel's output store (saves one HBM
    # round trip over the conv output at large H, W).
    idx_h = [(i * H) // out_size for i in range(out_size)]
    idx_w = [(j * W) // out_size for j in range(out_size)]
    assert max(idx_h) < H and max(idx_w) < W, "upsample would read junk rows/cols"
    y = jnp.take(y_pad, jnp.asarray(idx_h, jnp.int32), axis=1)
    y = jnp.take(y, jnp.asarray(idx_w, jnp.int32), axis=2)                # (B,56,56,E)

    # PyTorch ends with permute(0,2,3,1) on NCHW -> we are already NHWC.
    return y


# ---------------------------------------------------------------------------
# Pure-JAX reference (mirrors the PyTorch module op-for-op) for a sanity check.
# ---------------------------------------------------------------------------
def _reference_forward(x, w_pos, b_pos, w_proj, b_proj, in_chans):
    x = x.astype(jnp.float32)
    B, L, D = x.shape
    xT = jnp.transpose(x, (0, 2, 1))                                      # (B, D, L)
    xyz = jnp.einsum('oc,bcl->bol', w_pos[:, :, 0], xT[:, :3, :],
                     precision=lax.Precision.HIGHEST) + b_pos[None, :, None]
    xyz = jnp.maximum(xyz, 0.0)
    cat = jnp.concatenate([xyz, xT[:, 3:, :]], axis=1)                    # (B, Nc, L)
    Nc, C = cat.shape[1], cat.shape[2]
    H = W = math.isqrt((Nc * C) // in_chans)
    x_img = cat.reshape(B, in_chans, H, W)
    y = lax.conv_general_dilated(
        x_img, w_proj, window_strides=(1, 1), padding='SAME',
        dimension_numbers=('NCHW', 'OIHW', 'NCHW'),
        precision=lax.Precision.HIGHEST)
    y = y + b_proj[None, :, None, None]
    idx_h = (jnp.arange(56) * H) // 56
    idx_w = (jnp.arange(56) * W) // 56
    y = jnp.take(y, idx_h, axis=2)
    y = jnp.take(y, idx_w, axis=3)
    return jnp.transpose(y, (0, 2, 3, 1))                                 # (B, 56, 56, E)


if __name__ == "__main__":
    # Small shapes consistent with the module: 128 + (D-3) = 256 = in_chans, H=W=4.
    B, L, D = 2, 16, 131
    in_chans, embed_dim = 256, 128

    key = jax.random.PRNGKey(0)
    k1, k2, k3, k4, k5 = jax.random.split(key, 5)
    x = jax.random.normal(k1, (B, L, D), dtype=jnp.float32)
    w_pos = jax.random.normal(k2, (128, 3, 1), dtype=jnp.float32) * 0.1
    b_pos = jax.random.normal(k3, (128,), dtype=jnp.float32) * 0.1
    w_proj = jax.random.normal(k4, (embed_dim, in_chans, 3, 3), dtype=jnp.float32) * 0.02
    b_proj = jax.random.normal(k5, (embed_dim,), dtype=jnp.float32) * 0.02

    fwd = jax.jit(patch_embed_event, static_argnames=("in_chans",))
    out = jax.block_until_ready(fwd(x, w_pos, b_pos, w_proj, b_proj, in_chans=in_chans))

    assert out.shape == (B, 56, 56, embed_dim), out.shape
    assert out.dtype == jnp.float32

    ref = jax.block_until_ready(
        _reference_forward(x, w_pos, b_pos, w_proj, b_proj, in_chans))
    max_err = float(jnp.max(jnp.abs(out - ref)))
    # bf16 operands / f32 accumulation over K = 9*256 = 2304 -> expected max |err| ~1e-2.
    assert max_err < 5e-2, f"max abs error {max_err}"

    print("KERNEL_OK")
</pallas_src>

<mosaic_0001>
module attributes {stable_mosaic.version = 11 : i64} {
  func.func @kernel(%arg0: i32, %arg1: memref<1x16x128xbf16, #tpu.memory_space<vmem>>, %arg2: memref<1x16x128xbf16, #tpu.memory_space<vmem>>, %arg3: memref<3x768x128xbf16, #tpu.memory_space<vmem>>, %arg4: memref<1x128xf32, #tpu.memory_space<vmem>>, %arg5: memref<1x48x128xf32, #tpu.memory_space<vmem>>, %arg6: memref<64x768xbf16, #tpu.memory_space<vmem>>) attributes {dimension_semantics = [#tpu.dimension_semantics<parallel>], iteration_bounds = array<i64: 2>, scalar_prefetch = 0 : i64, scratch_operands = 1 : i64, tpu.core_type = #tpu.core_type<tc>, window_params = [{transform_indices = @transform_0, window_bounds = array<i64: 1, 16, 128>}, {transform_indices = @transform_1, window_bounds = array<i64: 1, 16, 128>}, {pipeline_mode = #tpu.pipeline_mode<synchronous>, transform_indices = @transform_2, window_bounds = array<i64: 3, 768, 128>}, {pipeline_mode = #tpu.pipeline_mode<synchronous>, transform_indices = @transform_3, window_bounds = array<i64: 1, 128>}, {transform_indices = @transform_4, window_bounds = array<i64: 1, 48, 128>}]} {
    %cst = arith.constant 0.000000e+00 : bf16
    %0 = vector.broadcast %cst : bf16 to vector<64x768xbf16>
    %c0 = arith.constant 0 : index
    %c0_0 = arith.constant 0 : index
    %1 = vector.load %arg6[%c0, %c0_0] : memref<64x768xbf16, #tpu.memory_space<vmem>>, vector<64x768xbf16>
    tpu.vector_store %arg6[%c0, %c0_0], %0 {strides = array<i32>} : memref<64x768xbf16, #tpu.memory_space<vmem>>, vector<64x768xbf16>,
    %c0_1 = arith.constant 0 : index
    %c0_2 = arith.constant 0 : index
    %c0_3 = arith.constant 0 : index
    %2 = vector.load %arg1[%c0_1, %c0_2, %c0_3] : memref<1x16x128xbf16, #tpu.memory_space<vmem>>, vector<1x4x128xbf16>
    %3 = vector.shape_cast %2 : vector<1x4x128xbf16> to vector<4x128xbf16>
    %c0_4 = arith.constant 0 : index
    %c0_5 = arith.constant 0 : index
    %c0_6 = arith.constant 0 : index
    %4 = vector.load %arg2[%c0_4, %c0_5, %c0_6] : memref<1x16x128xbf16, #tpu.memory_space<vmem>>, vector<1x4x128xbf16>
    %5 = vector.shape_cast %4 : vector<1x4x128xbf16> to vector<4x128xbf16>
    %6 = tpu.concatenate %3, %5 in 1 : vector<4x128xbf16>, vector<4x128xbf16> -> vector<4x256xbf16>
    %c9 = arith.constant 9 : index
    %c0_7 = arith.constant 0 : index
    %7 = vector.load %arg6[%c9, %c0_7] : memref<64x768xbf16, #tpu.memory_space<vmem>>, vector<4x256xbf16>
    tpu.vector_store %arg6[%c9, %c0_7], %6 {strides = array<i32>} : memref<64x768xbf16, #tpu.memory_space<vmem>>, vector<4x256xbf16>,
    %c8 = arith.constant 8 : index
    %c256 = arith.constant 256 : index
    %8 = vector.load %arg6[%c8, %c256] : memref<64x768xbf16, #tpu.memory_space<vmem>>, vector<4x256xbf16>
    tpu.vector_store %arg6[%c8, %c256], %6 {strides = array<i32>} : memref<64x768xbf16, #tpu.memory_space<vmem>>, vector<4x256xbf16>,
    %9 = vector.extract_strided_slice %6 {offsets = [1, 0], sizes = [3, 256], strides = [1, 1]} : vector<4x256xbf16> to vector<3x256xbf16>
    %c8_8 = arith.constant 8 : index
    %c512 = arith.constant 512 : index
    %10 = vector.load %arg6[%c8_8, %c512] : memref<64x768xbf16, #tpu.memory_space<vmem>>, vector<3x256xbf16>
    tpu.vector_store %arg6[%c8_8, %c512], %9 {strides = array<i32>} : memref<64x768xbf16, #tpu.memory_space<vmem>>, vector<3x256xbf16>,
    %c0_9 = arith.constant 0 : index
    %c4 = arith.constant 4 : index
    %c0_10 = arith.constant 0 : index
    %11 = vector.load %arg1[%c0_9, %c4, %c0_10] : memref<1x16x128xbf16, #tpu.memory_space<vmem>>, vector<1x4x128xbf16>
    %12 = vector.shape_cast %11 : vector<1x4x128xbf16> to vector<4x128xbf16>
    %c0_11 = arith.constant 0 : index
    %c4_12 = arith.constant 4 : index
    %c0_13 = arith.constant 0 : index
    %13 = vector.load %arg2[%c0_11, %c4_12, %c0_13] : memref<1x16x128xbf16, #tpu.memory_space<vmem>>, vector<1x4x128xbf16>
    %14 = vector.shape_cast %13 : vector<1x4x128xbf16> to vector<4x128xbf16>
    %15 = tpu.concatenate %12, %14 in 1 : vector<4x128xbf16>, vector<4x128xbf16> -> vector<4x256xbf16>
    %c17 = arith.constant 17 : index
    %c0_14 = arith.constant 0 : index
    %16 = vector.load %arg6[%c17, %c0_14] : memref<64x768xbf16, #tpu.memory_space<vmem>>, vector<4x256xbf16>
    tpu.vector_store %arg6[%c17, %c0_14], %15 {strides = array<i32>} : memref<64x768xbf16, #tpu.memory_space<vmem>>, vector<4x256xbf16>,
    %c16 = arith.constant 16 : index
    %c256_15 = arith.constant 256 : index
    %17 = vector.load %arg6[%c16, %c256_15] : memref<64x768xbf16, #tpu.memory_space<vmem>>, vector<4x256xbf16>
    tpu.vector_store %arg6[%c16, %c256_15], %15 {strides = array<i32>} : memref<64x768xbf16, #tpu.memory_space<vmem>>, vector<4x256xbf16>,
    %18 = vector.extract_strided_slice %15 {offsets = [1, 0], sizes = [3, 256], strides = [1, 1]} : vector<4x256xbf16> to vector<3x256xbf16>
    %c16_16 = arith.constant 16 : index
    %c512_17 = arith.constant 512 : index
    %19 = vector.load %arg6[%c16_16, %c512_17] : memref<64x768xbf16, #tpu.memory_space<vmem>>, vector<3x256xbf16>
    tpu.vector_store %arg6[%c16_16, %c512_17], %18 {strides = array<i32>} : memref<64x768xbf16, #tpu.memory_space<vmem>>, vector<3x256xbf16>,
    %c0_18 = arith.constant 0 : index
    %c8_19 = arith.constant 8 : index
    %c0_20 = arith.constant 0 : index
    %20 = vector.load %arg1[%c0_18, %c8_19, %c0_20] : memref<1x16x128xbf16, #tpu.memory_space<vmem>>, vector<1x4x128xbf16>
    %21 = vector.shape_cast %20 : vector<1x4x128xbf16> to vector<4x128xbf16>
    %c0_21 = arith.constant 0 : index
    %c8_22 = arith.constant 8 : index
    %c0_23 = arith.constant 0 : index
    %22 = vector.load %arg2[%c0_21, %c8_22, %c0_23] : memref<1x16x128xbf16, #tpu.memory_space<vmem>>, vector<1x4x128xbf16>
    %23 = vector.shape_cast %22 : vector<1x4x128xbf16> to vector<4x128xbf16>
    %24 = tpu.concatenate %21, %23 in 1 : vector<4x128xbf16>, vector<4x128xbf16> -> vector<4x256xbf16>
    %c25 = arith.constant 25 : index
    %c0_24 = arith.constant 0 : index
    %25 = vector.load %arg6[%c25, %c0_24] : memref<64x768xbf16, #tpu.memory_space<vmem>>, vector<4x256xbf16>
    tpu.vector_store %arg6[%c25, %c0_24], %24 {strides = array<i32>} : memref<64x768xbf16, #tpu.memory_space<vmem>>, vector<4x256xbf16>,
    %c24 = arith.constant 24 : index
    %c256_25 = arith.constant 256 : index
    %26 = vector.load %arg6[%c24, %c256_25] : memref<64x768xbf16, #tpu.memory_space<vmem>>, vector<4x256xbf16>
    tpu.vector_store %arg6[%c24, %c256_25], %24 {strides = array<i32>} : memref<64x768xbf16, #tpu.memory_space<vmem>>, vector<4x256xbf16>,
    %27 = vector.extract_strided_slice %24 {offsets = [1, 0], sizes = [3, 256], strides = [1, 1]} : vector<4x256xbf16> to vector<3x256xbf16>
    %c24_26 = arith.constant 24 : index
    %c512_27 = arith.constant 512 : index
    %28 = vector.load %arg6[%c24_26, %c512_27] : memref<64x768xbf16, #tpu.memory_space<vmem>>, vector<3x256xbf16>
    tpu.vector_store %arg6[%c24_26, %c512_27], %27 {strides = array<i32>} : memref<64x768xbf16, #tpu.memory_space<vmem>>, vector<3x256xbf16>,
    %c0_28 = arith.constant 0 : index
    %c12 = arith.constant 12 : index
    %c0_29 = arith.constant 0 : index
    %29 = vector.load %arg1[%c0_28, %c12, %c0_29] : memref<1x16x128xbf16, #tpu.memory_space<vmem>>, vector<1x4x128xbf16>
    %30 = vector.shape_cast %29 : vector<1x4x128xbf16> to vector<4x128xbf16>
    %c0_30 = arith.constant 0 : index
    %c12_31 = arith.constant 12 : index
    %c0_32 = arith.constant 0 : index
    %31 = vector.load %arg2[%c0_30, %c12_31, %c0_32] : memref<1x16x128xbf16, #tpu.memory_space<vmem>>, vector<1x4x128xbf16>
    %32 = vector.shape_cast %31 : vector<1x4x128xbf16> to vector<4x128xbf16>
    %33 = tpu.concatenate %30, %32 in 1 : vector<4x128xbf16>, vector<4x128xbf16> -> vector<4x256xbf16>
    %c33 = arith.constant 33 : index
    %c0_33 = arith.constant 0 : index
    %34 = vector.load %arg6[%c33, %c0_33] : memref<64x768xbf16, #tpu.memory_space<vmem>>, vector<4x256xbf16>
    tpu.vector_store %arg6[%c33, %c0_33], %33 {strides = array<i32>} : memref<64x768xbf16, #tpu.memory_space<vmem>>, vector<4x256xbf16>,
    %c32 = arith.constant 32 : index
    %c256_34 = arith.constant 256 : index
    %35 = vector.load %arg6[%c32, %c256_34] : memref<64x768xbf16, #tpu.memory_space<vmem>>, vector<4x256xbf16>
    tpu.vector_store %arg6[%c32, %c256_34], %33 {strides = array<i32>} : memref<64x768xbf16, #tpu.memory_space<vmem>>, vector<4x256xbf16>,
    %36 = vector.extract_strided_slice %33 {offsets = [1, 0], sizes = [3, 256], strides = [1, 1]} : vector<4x256xbf16> to vector<3x256xbf16>
    %c32_35 = arith.constant 32 : index
    %c512_36 = arith.constant 512 : index
    %37 = vector.load %arg6[%c32_35, %c512_36] : memref<64x768xbf16, #tpu.memory_space<vmem>>, vector<3x256xbf16>
    tpu.vector_store %arg6[%c32_35, %c512_36], %36 {strides = array<i32>} : memref<64x768xbf16, #tpu.memory_space<vmem>>, vector<3x256xbf16>,
    %cst_37 = arith.constant 0.000000e+00 : f32
    %38 = vector.broadcast %cst_37 : f32 to vector<48x128xf32>
    %c0_38 = arith.constant 0 : index
    %c0_39 = arith.constant 0 : index
    %39 = vector.load %arg6[%c0_38, %c0_39] : memref<64x768xbf16, #tpu.memory_space<vmem>>, vector<48x768xbf16>
    %c0_40 = arith.constant 0 : index
    %c0_41 = arith.constant 0 : index
    %c0_42 = arith.constant 0 : index
    %40 = vector.load %arg3[%c0_40, %c0_41, %c0_42] : memref<3x768x128xbf16, #tpu.memory_space<vmem>>, vector<1x768x128xbf16>
    %41 = vector.shape_cast %40 : vector<1x768x128xbf16> to vector<768x128xbf16>
    %cst_43 = arith.constant dense<0.000000e+00> : vector<48x128xf32>
    %42 = tpu.matmul %39, %41, %cst_43 {dimension_numbers = #tpu.dot_dimension_numbers<[1], [0], [0], [1], [0, 0, 1, 1], [], []>} : vector<48x768xbf16>, vector<768x128xbf16>, vector<48x128xf32> -> vector<48x128xf32>
    %43 = arith.addf %38, %42 : vector<48x128xf32>
    %c8_44 = arith.constant 8 : index
    %c0_45 = arith.constant 0 : index
    %44 = vector.load %arg6[%c8_44, %c0_45] : memref<64x768xbf16, #tpu.memory_space<vmem>>, vector<48x768xbf16>
    %c1 = arith.constant 1 : index
    %c0_46 = arith.constant 0 : index
    %c0_47 = arith.constant 0 : index
    %45 = vector.load %arg3[%c1, %c0_46, %c0_47] : memref<3x768x128xbf16, #tpu.memory_space<vmem>>, vector<1x768x128xbf16>
    %46 = vector.shape_cast %45 : vector<1x768x128xbf16> to vector<768x128xbf16>
    %cst_48 = arith.constant dense<0.000000e+00> : vector<48x128xf32>
    %47 = tpu.matmul %44, %46, %cst_48 {dimension_numbers = #tpu.dot_dimension_numbers<[1], [0], [0], [1], [0, 0, 1, 1], [], []>} : vector<48x768xbf16>, vector<768x128xbf16>, vector<48x128xf32> -> vector<48x128xf32>
    %48 = arith.addf %43, %47 : vector<48x128xf32>
    %c16_49 = arith.constant 16 : index
    %c0_50 = arith.constant 0 : index
    %49 = vector.load %arg6[%c16_49, %c0_50] : memref<64x768xbf16, #tpu.memory_space<vmem>>, vector<48x768xbf16>
    %c2 = arith.constant 2 : index
    %c0_51 = arith.constant 0 : index
    %c0_52 = arith.constant 0 : index
    %50 = vector.load %arg3[%c2, %c0_51, %c0_52] : memref<3x768x128xbf16, #tpu.memory_space<vmem>>, vector<1x768x128xbf16>
    %51 = vector.shape_cast %50 : vector<1x768x128xbf16> to vector<768x128xbf16>
    %cst_53 = arith.constant dense<0.000000e+00> : vector<48x128xf32>
    %52 = tpu.matmul %49, %51, %cst_53 {dimension_numbers = #tpu.dot_dimension_numbers<[1], [0], [0], [1], [0, 0, 1, 1], [], []>} : vector<48x768xbf16>, vector<768x128xbf16>, vector<48x128xf32> -> vector<48x128xf32>
    %53 = arith.addf %48, %52 : vector<48x128xf32>
    %c0_54 = arith.constant 0 : index
    %c0_55 = arith.constant 0 : index
    %54 = vector.load %arg4[%c0_54, %c0_55] : memref<1x128xf32, #tpu.memory_space<vmem>>, vector<1x128xf32>
    %55 = vector.broadcast %54 : vector<1x128xf32> to vector<48x128xf32>
    %56 = arith.addf %53, %55 : vector<48x128xf32>
    %c0_56 = arith.constant 0 : index
    %c0_57 = arith.constant 0 : index
    %c0_58 = arith.constant 0 : index
    %57 = vector.load %arg5[%c0_56, %c0_57, %c0_58] : memref<1x48x128xf32, #tpu.memory_space<vmem>>, vector<1x48x128xf32>
    %58 = vector.shape_cast %57 : vector<1x48x128xf32> to vector<48x128xf32>
    %59 = vector.shape_cast %56 : vector<48x128xf32> to vector<1x48x128xf32>
    tpu.vector_store %arg5[%c0_56, %c0_57, %c0_58], %59 {strides = array<i32>} : memref<1x48x128xf32, #tpu.memory_space<vmem>>, vector<1x48x128xf32>,
    return
  }
  func.func @transform_0(%arg0: i32) -> (i32, i32, i32) {
    %c0_i32 = arith.constant 0 : i32
    %c0_i32_0 = arith.constant 0 : i32
    %c0_i32_1 = arith.constant 0 : i32
    return %arg0, %c0_i32, %c0_i32_0 : i32, i32, i32
  }
  func.func @transform_1(%arg0: i32) -> (i32, i32, i32) {
    %c0_i32 = arith.constant 0 : i32
    %c0_i32_0 = arith.constant 0 : i32
    %c0_i32_1 = arith.constant 0 : i32
    return %arg0, %c0_i32, %c0_i32_0 : i32, i32, i32
  }
  func.func @transform_2(%arg0: i32) -> (i32, i32, i32) {
    %c0_i32 = arith.constant 0 : i32
    %c0_i32_0 = arith.constant 0 : i32
    %c0_i32_1 = arith.constant 0 : i32
    %c0_i32_2 = arith.constant 0 : i32
    return %c0_i32, %c0_i32_0, %c0_i32_1 : i32, i32, i32
  }
  func.func @transform_3(%arg0: i32) -> (i32, i32) {
    %c0_i32 = arith.constant 0 : i32
    %c0_i32_0 = arith.constant 0 : i32
    %c0_i32_1 = arith.constant 0 : i32
    return %c0_i32, %c0_i32_0 : i32, i32
  }
  func.func @transform_4(%arg0: i32) -> (i32, i32, i32) {
    %c0_i32 = arith.constant 0 : i32
    %c0_i32_0 = arith.constant 0 : i32
    %c0_i32_1 = arith.constant 0 : i32
    return %arg0, %c0_i32, %c0_i32_0 : i32, i32, i32
  }
}

</mosaic_0001>

<llo_original>
// kernel: patch_embed_event.1
$region0: #{patch_embed_event.1}
  #allocation0 [shape = 'u32[]', space=smem, size = 0x4, offset = 0x4, fixed_abs, tag = 'smem constant byte address 0x4 - core index']
  #allocation1 [shape = 'u32[144,128]{1,0:T(1,128)}', space=vmem, size = 0x12000, scoped, tag = 'internal scratch']
  #allocation2 [shape = 'bf16[64,768]{1,0:T(16,128)(2,1)}', space=vmem, size = 0x18000, scoped, tag = 'scratch operand']
  %s0 = inlined_call_operand.vmem [shape: bf16[2,16,128], index: 0, kind: input, shape index: {}]
  %s1 = inlined_call_operand.vmem [shape: bf16[2,16,128], index: 1, kind: input, shape index: {}]
  %s2 = inlined_call_operand.vmem [shape: bf16[3,768,128], index: 2, kind: input, shape index: {}]
  %s3 = inlined_call_operand.hbm [shape: f32[1,128], index: 3, kind: input, shape index: {}]
  %s4 = inlined_call_operand.vmem [shape: f32[2,48,128], index: 4, kind: output, shape index: {}]
  %s5 = sld [smem:[#allocation0]]
  $region53: #{patch_embed_event.1} parent=0
    _
  %s7 = ssub.s32 1, %s5
  %s8 = scalar_select 0, %s7, %s5
  $region1: #{patch_embed_event.1} parent=0
    #allocation3 [shape = 'u8[512]{0}', space=vmem, size = 0x400, scoped, tag = 'input window, operand 3, single buffered']
    #allocation4 [shape = 's32[2]{0}', space=sflag, size = 0x8, scoped, tag = 'scoped memory for patch_embed_event.1']
    %9 = vsyncpa [#allocation4], 0
    loop: start=0, step=1, limit=4
    $region2: #{patch_embed_event.1} parent=1 // loop_pre_header
      _
    $region3: #{patch_embed_event.1} parent=1 // loop_header
      %s11 = sphi 0, %s15
      %p12 = scmp.ge.s32.totalorder %s11, 4
      %s21 = sphi 0, %s23
      %s24 = sphi 0, %s21
      %s25 = sphi 0, %s24
      %s41 = sphi 0, %s25
      %s47 = sphi 0, %s49
      %s50 = sphi 0, %s47
      %s51 = sphi 0, %s50
      %s67 = sphi 0, %s51
      %s71 = sphi 0, %s71
      %s73 = sphi 0, %s71
      %s74 = sphi 0, %s73
      %s88 = sphi 0, %s74
      %s92 = sphi 0, %s92
      %s94 = sphi 0, %s92
      %s95 = sphi 0, %s94
      %s109 = sphi 0, %s95
      %s115 = sphi 0, %s117
      %s118 = sphi 0, %s115
      %s119 = sphi 0, %s118
      %s135 = sphi 0, %s119
    $region4: #{patch_embed_event.1} parent=1 // loop_header_branch
      %14 = sbr.rel (%p12) target = $region8
    $region5: #{patch_embed_event.1} parent=1 // loop_body
      %s16 = ssub.s32 %s11, 1
      %s17 = ssub.s32 %s11, 2
      %s18 = sadd.s32 %s11, 1
      %s19 = ssub.s32 %s11, %s18
      %p20 = scmp.eq.s32.totalorder %s19, 0
      %s22 = sadd.s32 %s21, 1
      %s23 = scalar_select %p20, %s21, %s22
      %p26 = pneg %p20
      %p27 = scmp.eq.s32.totalorder %s11, 1
      %p28 = por %p26, %p27
      %p29 = scmp.ne.s32.totalorder %s21, %s24
      %p30 = scmp.eq.s32.totalorder %s11, 0
      %p31 = por %p29, %p30
      %p32 = scmp.ne.s32.totalorder %s21, %s24
      %p33 = scmp.eq.s32.totalorder %s16, 1
      %p34 = por %p32, %p33
      %p35 = scmp.ne.s32.totalorder %s24, %s25
      %p36 = scmp.eq.s32.totalorder %s16, 0
      %p37 = por %p35, %p36
      %p38 = scmp.ne.s32.totalorder %s24, %s25
      %p39 = scmp.eq.s32.totalorder %s17, 1
      %p40 = por %p38, %p39
      %p42 = scmp.ne.s32.totalorder %s25, %s41
      %p43 = scmp.eq.s32.totalorder %s17, 0
      %p44 = por %p42, %p43
      %s45 = ssub.s32 %s11, %s18
      %p46 = scmp.eq.s32.totalorder %s45, 0
      %s48 = sadd.s32 %s47, 1
      %s49 = scalar_select %p46, %s47, %s48
      %p52 = pneg %p46
      %p53 = scmp.eq.s32.totalorder %s11, 1
      %p54 = por %p52, %p53
      %p55 = scmp.ne.s32.totalorder %s47, %s50
      %p56 = scmp.eq.s32.totalorder %s11, 0
      %p57 = por %p55, %p56
      %p58 = scmp.ne.s32.totalorder %s47, %s50
      %p59 = scmp.eq.s32.totalorder %s16, 1
      %p60 = por %p58, %p59
      %p61 = scmp.ne.s32.totalorder %s50, %s51
      %p62 = scmp.eq.s32.totalorder %s16, 0
      %p63 = por %p61, %p62
      %p64 = scmp.ne.s32.totalorder %s50, %s51
      %p65 = scmp.eq.s32.totalorder %s17, 1
      %p66 = por %p64, %p65
      %p68 = scmp.ne.s32.totalorder %s51, %s67
      %p69 = scmp.eq.s32.totalorder %s17, 0
      %p70 = por %p68, %p69
      %s72 = sadd.s32 %s71, 1
      %p75 = scmp.eq.s32.totalorder %s11, 1
      %p76 = scmp.ne.s32.totalorder %s71, %s73
      %p77 = scmp.eq.s32.totalorder %s11, 0
      %p78 = por %p76, %p77
      %p79 = scmp.ne.s32.totalorder %s71, %s73
      %p80 = scmp.eq.s32.totalorder %s16, 1
      %p81 = por %p79, %p80
      %p82 = scmp.ne.s32.totalorder %s73, %s74
      %p83 = scmp.eq.s32.totalorder %s16, 0
      %p84 = por %p82, %p83
      %p85 = scmp.ne.s32.totalorder %s73, %s74
      %p86 = scmp.eq.s32.totalorder %s17, 1
      %p87 = por %p85, %p86
      %p89 = scmp.ne.s32.totalorder %s74, %s88
      %p90 = scmp.eq.s32.totalorder %s17, 0
      %p91 = por %p89, %p90
      %s93 = sadd.s32 %s92, 1
      %p96 = scmp.eq.s32.totalorder %s11, 1
      %p97 = scmp.ne.s32.totalorder %s92, %s94
      %p98 = scmp.eq.s32.totalorder %s11, 0
      %p99 = por %p97, %p98
      %p100 = scmp.ne.s32.totalorder %s92, %s94
      %p101 = scmp.eq.s32.totalorder %s16, 1
      %p102 = por %p100, %p101
      %p103 = scmp.ne.s32.totalorder %s94, %s95
      %p104 = scmp.eq.s32.totalorder %s16, 0
      %p105 = por %p103, %p104
      %p106 = scmp.ne.s32.totalorder %s94, %s95
      %p107 = scmp.eq.s32.totalorder %s17, 1
      %p108 = por %p106, %p107
      %p110 = scmp.ne.s32.totalorder %s95, %s109
      %p111 = scmp.eq.s32.totalorder %s17, 0
      %p112 = por %p110, %p111
      %s113 = ssub.s32 %s11, %s18
      %p114 = scmp.eq.s32.totalorder %s113, 0
      %s116 = sadd.s32 %s115, 1
      %s117 = scalar_select %p114, %s115, %s116
      %p120 = pneg %p114
      %p121 = scmp.eq.s32.totalorder %s11, 1
      %p122 = por %p120, %p121
      %p123 = scmp.ne.s32.totalorder %s115, %s118
      %p124 = scmp.eq.s32.totalorder %s11, 0
      %p125 = por %p123, %p124
      %p126 = scmp.ne.s32.totalorder %s115, %s118
      %p127 = scmp.eq.s32.totalorder %s16, 1
      %p128 = por %p126, %p127
      %p129 = scmp.ne.s32.totalorder %s118, %s119
      %p130 = scmp.eq.s32.totalorder %s16, 0
      %p131 = por %p129, %p130
      %p132 = scmp.ne.s32.totalorder %s118, %s119
      %p133 = scmp.eq.s32.totalorder %s17, 1
      %p134 = por %p132, %p133
      %p136 = scmp.ne.s32.totalorder %s119, %s135
      %p137 = scmp.eq.s32.totalorder %s17, 0
      %p138 = por %p136, %p137
      %p139 = scmp.le.s32.totalorder 1, %s11
      %p140 = scmp.lt.s32.totalorder %s11, 3
      %p141 = pnand %p139, %p140
      %p142 = pneg %p141
      // Predicated region
      $region9: #{patch_embed_event.1} parent=5 // pred_check
        _
      $region10: #{patch_embed_event.1} parent=5 // pred_check_branch
        %144 = sbr.rel (%p141) target = $region12
      $region11: #{patch_embed_event.1} parent=5 // pred_region
        %s145 = ssub.s32 %s11, 1
        // Predicated region
        $region13: #{patch_embed_event.1} parent=11 // pred_check
          %p146 = pneg %p84
        $region14: #{patch_embed_event.1} parent=11 // pred_check_branch
          %148 = sbr.rel (%p146) target = $region16
        $region15: #{patch_embed_event.1} parent=11 // pred_region
          _
        $region16: #{patch_embed_event.1} parent=11 // pred_fallthru
          _
        // Predicated region
        $region17: #{patch_embed_event.1} parent=11 // pred_check
          %p149 = pneg %p105
        $region18: #{patch_embed_event.1} parent=11 // pred_check_branch
          %151 = sbr.rel (%p149) target = $region20
        $region19: #{patch_embed_event.1} parent=11 // pred_region
          %s153 = ssub.s32 16, 16
          %154 = vsyncadd [#allocation4], %s153
          %s156 = sshll.u32 [#allocation3], 4
          %s157 = int_to_ptr.vmem [resolvable:$true] %s156
          %159 = dma.hbm_to_vmem [thread:$0]  %s3, 16, %s157, [#allocation4]
        $region20: #{patch_embed_event.1} parent=11 // pred_fallthru
          _
      $region12: #{patch_embed_event.1} parent=5 // pred_fallthru
        _
      %p160 = scmp.lt.s32.totalorder %s11, 2
      // Predicated region
      $region21: #{patch_embed_event.1} parent=5 // pred_check
        %p161 = pneg %p160
      $region22: #{patch_embed_event.1} parent=5 // pred_check_branch
        %163 = sbr.rel (%p161) target = $region24
      $region23: #{patch_embed_event.1} parent=5 // pred_region
        // Predicated region
        $region25: #{patch_embed_event.1} parent=23 // pred_check
          %p164 = pneg %p31
        $region26: #{patch_embed_event.1} parent=23 // pred_check_branch
          %166 = sbr.rel (%p164) target = $region28
        $region27: #{patch_embed_event.1} parent=23 // pred_region
          %p167 = scmp.lt.s32.totalorder %s11, 1
          %s168 = scalar_select %p167, %s11, 1
          %s169 = smul.addr %s168, 2
          %s170 = smul.addr %s169, 4
          %s171 = scalar_lea.vmem %s0, %s170
        $region28: #{patch_embed_event.1} parent=23 // pred_fallthru
          _
        // Predicated region
        $region29: #{patch_embed_event.1} parent=23 // pred_check
          %p172 = pneg %p57
        $region30: #{patch_embed_event.1} parent=23 // pred_check_branch
          %174 = sbr.rel (%p172) target = $region32
        $region31: #{patch_embed_event.1} parent=23 // pred_region
          %p175 = scmp.lt.s32.totalorder %s11, 1
          %s176 = scalar_select %p175, %s11, 1
          %s177 = smul.addr %s176, 2
          %s178 = smul.addr %s177, 4
          %s179 = scalar_lea.vmem %s1, %s178
        $region32: #{patch_embed_event.1} parent=23 // pred_fallthru
          _
      $region24: #{patch_embed_event.1} parent=5 // pred_fallthru
        _
      %p180 = scmp.le.s32.totalorder 1, %s11
      %p181 = scmp.lt.s32.totalorder %s11, 3
      %p182 = pnand %p180, %p181
      %p183 = pneg %p182
      // Predicated region
      $region33: #{patch_embed_event.1} parent=5 // pred_check
        _
      $region34: #{patch_embed_event.1} parent=5 // pred_check_branch
        %185 = sbr.rel (%p182) target = $region36
      $region35: #{patch_embed_event.1} parent=5 // pred_region
        %s186 = ssub.s32 %s11, 1
        // Predicated region
        $region37: #{patch_embed_event.1} parent=35 // pred_check
          %p187 = pneg %p105
        $region38: #{patch_embed_event.1} parent=35 // pred_check_branch
          %189 = sbr.rel (%p187) target = $region40
        $region39: #{patch_embed_event.1} parent=35 // pred_region
          %190 = dma.done [#allocation4], 16
        $region40: #{patch_embed_event.1} parent=35 // pred_fallthru
          _
        %p191 = scmp.lt.s32.totalorder %s16, 1
        %s192 = scalar_select %p191, %s16, 1
        %s193 = smul.addr %s192, 2
        %s194 = smul.addr %s193, 4
        %s195 = scalar_lea.vmem %s0, %s194
        %p196 = pneg %p37
        %p197 = pneg %p34
        %p198 = scmp.lt.s32.totalorder %s16, 1
        %s199 = scalar_select %p198, %s16, 1
        %s200 = smul.addr %s199, 2
        %s201 = smul.addr %s200, 4
        %s202 = scalar_lea.vmem %s1, %s201
        %p203 = pneg %p63
        %p204 = pneg %p60
        %p205 = pneg %p84
        %p206 = pneg %p81
        %p207 = pneg %p105
        %p208 = pneg %p102
        %p209 = pneg %p131
        %p210 = pneg %p128
        %p211 = scmp.lt.s32.totalorder %s16, 1
        %s212 = scalar_select %p211, %s16, 1
        %s213 = smul.addr %s212, 6
        %s214 = smul.addr %s213, 8
        %s215 = scalar_lea.vmem %s4, %s214
        %p216 = scmp.lt.s32.totalorder %s16, 1
        %s217 = scalar_select %p216, %s16, 1
        %s218 = smul.addr %s217, 2
        %s219 = smul.addr %s218, 4
        %s220 = scalar_lea.vmem %s0, %s219
        %p221 = scmp.lt.s32.totalorder %s16, 1
        %s222 = scalar_select %p221, %s16, 1
        %s223 = smul.addr %s222, 2
        %s224 = smul.addr %s223, 4
        %s225 = scalar_lea.vmem %s1, %s224
        %p226 = scmp.lt.s32.totalorder %s16, 1
        %s227 = scalar_select %p226, %s16, 1
        %s228 = smul.addr %s227, 6
        %s229 = smul.addr %s228, 8
        %s230 = scalar_lea.vmem %s4, %s229
        %232 = vst [vmem:[#allocation2] sm:$0xff] 0
        %233 = vst [vmem:[#allocation2 + $0x8] sm:$0xff] 0
        %234 = vst [vmem:[#allocation2 + $0x10] sm:$0xff] 0
        %235 = vst [vmem:[#allocation2 + $0x18] sm:$0xff] 0
        %236 = vst [vmem:[#allocation2 + $0x20] sm:$0xff] 0
        %237 = vst [vmem:[#allocation2 + $0x28] sm:$0xff] 0
        %238 = vst [vmem:[#allocation2 + $0x30] sm:$0xff] 0
        %239 = vst [vmem:[#allocation2 + $0x38] sm:$0xff] 0
        %240 = vst [vmem:[#allocation2 + $0x40] sm:$0xff] 0
        %241 = vst [vmem:[#allocation2 + $0x48] sm:$0xff] 0
        %242 = vst [vmem:[#allocation2 + $0x50] sm:$0xff] 0
        %243 = vst [vmem:[#allocation2 + $0x58] sm:$0xff] 0
        %244 = vst [vmem:[#allocation2 + $0x60] sm:$0xff] 0
        %245 = vst [vmem:[#allocation2 + $0x68] sm:$0xff] 0
        %246 = vst [vmem:[#allocation2 + $0x70] sm:$0xff] 0
        %247 = vst [vmem:[#allocation2 + $0x78] sm:$0xff] 0
        %248 = vst [vmem:[#allocation2 + $0x80] sm:$0xff] 0
        %249 = vst [vmem:[#allocation2 + $0x88] sm:$0xff] 0
        %250 = vst [vmem:[#allocation2 + $0x90] sm:$0xff] 0
        %251 = vst [vmem:[#allocation2 + $0x98] sm:$0xff] 0
        %252 = vst [vmem:[#allocation2 + $0xa0] sm:$0xff] 0
        %253 = vst [vmem:[#allocation2 + $0xa8] sm:$0xff] 0
        %254 = vst [vmem:[#allocation2 + $0xb0] sm:$0xff] 0
        %255 = vst [vmem:[#allocation2 + $0xb8] sm:$0xff] 0
        %v256 = vld [vmem:[%s220] sm:$0x3]
        %v257 = vld [vmem:[%s225] sm:$0x3]
        %v259 = vshrl.u32 %v256, 16
        %v261 = vrot.slane %v259, 3
        %v262 = vshll.u32 %v256, 16
        %v264 = vrot.slane %v262, 4
        %v265 = vor.u32 %v261, %v264
        %v267 = vshrl.u32 %v257, 16
        %v269 = vrot.slane %v267, 3
        %v270 = vshll.u32 %v257, 16
        %v272 = vrot.slane %v270, 4
        %v273 = vor.u32 %v269, %v272
        %vm276 = vcmask 1046532
        %vm277 = vsmask.f32 6418
        %vm278 = vmand %vm276, %vm277
        %v279 = vld [vmem:[#allocation2] sm:$0x70]
        %v280 = vsel %vm278, %v265, %v279
        %281 = vst [vmem:[#allocation2] sm:$0x70] %v280
        %v282 = vld [vmem:[#allocation2 + $0x8] sm:$0x70]
        %v283 = vsel %vm278, %v273, %v282
        %284 = vst [vmem:[#allocation2 + $0x8] sm:$0x70] %v283
        %v287 = vrot.slane %v256, 4
        %v288 = vrot.slane %v257, 4
        %291 = vst [vmem:[#allocation2 + $0x10] sm:$0x30] %v287
        %292 = vst [vmem:[#allocation2 + $0x18] sm:$0x30] %v288
        %v293 = vrot.slane %v259, 4
        %v294 = vrot.slane %v262, 5
        %v295 = vor.u32 %v293, %v294
        %v296 = vrot.slane %v267, 4
        %v297 = vrot.slane %v270, 5
        %v298 = vor.u32 %v296, %v297
        %vm301 = vcmask 1045508
        %vm302 = vsmask.f32 5376
        %vm303 = vmand %vm301, %vm302
        %v304 = vld [vmem:[#allocation2 + $0x20] sm:$0x30]
        %v305 = vsel %vm303, %v295, %v304
        %306 = vst [vmem:[#allocation2 + $0x20] sm:$0x30] %v305
        %v307 = vld [vmem:[#allocation2 + $0x28] sm:$0x30]
        %v308 = vsel %vm303, %v298, %v307
        %309 = vst [vmem:[#allocation2 + $0x28] sm:$0x30] %v308
        %v310 = vld [vmem:[%s220] sm:$0xc]
        %v311 = vld [vmem:[%s225] sm:$0xc]
        %v313 = vshrl.u32 %v310, 16
        %v315 = vrot.slane %v313, 1
        %v316 = vshll.u32 %v310, 16
        %v318 = vrot.slane %v316, 2
        %v319 = vor.u32 %v315, %v318
        %v321 = vshrl.u32 %v311, 16
        %v323 = vrot.slane %v321, 1
        %v324 = vshll.u32 %v311, 16
        %v326 = vrot.slane %v324, 2
        %v327 = vor.u32 %v323, %v326
        %vm330 = vcmask 1042432
        %vm331 = vsmask.f32 2306
        %vm332 = vmand %vm330, %vm331
        %v333 = vld [vmem:[#allocation2 + $0x30] sm:$0x7]
        %v334 = vsel %vm332, %v319, %v333
        %335 = vst [vmem:[#allocation2 + $0x30] sm:$0x7] %v334
        %v336 = vld [vmem:[#allocation2 + $0x38] sm:$0x7]
        %v337 = vsel %vm332, %v327, %v336
        %338 = vst [vmem:[#allocation2 + $0x38] sm:$0x7] %v337
        %v341 = vrot.slane %v310, 2
        %v342 = vrot.slane %v311, 2
        %345 = vst [vmem:[#allocation2 + $0x40] sm:$0x3] %v341
        %346 = vst [vmem:[#allocation2 + $0x48] sm:$0x3] %v342
        %v347 = vrot.slane %v313, 2
        %v348 = vrot.slane %v316, 3
        %v349 = vor.u32 %v347, %v348
        %v350 = vrot.slane %v321, 2
        %v351 = vrot.slane %v324, 3
        %v352 = vor.u32 %v350, %v351
        %vm355 = vcmask 1041408
        %vm356 = vsmask.f32 1280
        %vm357 = vmand %vm355, %vm356
        %v358 = vld [vmem:[#allocation2 + $0x50] sm:$0x3]
        %v359 = vsel %vm357, %v349, %v358
        %360 = vst [vmem:[#allocation2 + $0x50] sm:$0x3] %v359
        %v361 = vld [vmem:[#allocation2 + $0x58] sm:$0x3]
        %v362 = vsel %vm357, %v352, %v361
        %363 = vst [vmem:[#allocation2 + $0x58] sm:$0x3] %v362
        %v364 = vld [vmem:[%s220 + $0x4] sm:$0x3]
        %v365 = vld [vmem:[%s225 + $0x4] sm:$0x3]
        %v367 = vshrl.u32 %v364, 16
        %v369 = vrot.slane %v367, 3
        %v370 = vshll.u32 %v364, 16
        %v372 = vrot.slane %v370, 4
        %v373 = vor.u32 %v369, %v372
        %v375 = vshrl.u32 %v365, 16
        %v377 = vrot.slane %v375, 3
        %v378 = vshll.u32 %v365, 16
        %v380 = vrot.slane %v378, 4
        %v381 = vor.u32 %v377, %v380
        %v384 = vld [vmem:[#allocation2 + $0x30] sm:$0x70]
        %v385 = vsel %vm278, %v373, %v384
        %386 = vst [vmem:[#allocation2 + $0x30] sm:$0x70] %v385
        %v387 = vld [vmem:[#allocation2 + $0x38] sm:$0x70]
        %v388 = vsel %vm278, %v381, %v387
        %389 = vst [vmem:[#allocation2 + $0x38] sm:$0x70] %v388
        %v392 = vrot.slane %v364, 4
        %v393 = vrot.slane %v365, 4
        %396 = vst [vmem:[#allocation2 + $0x40] sm:$0x30] %v392
        %397 = vst [vmem:[#allocation2 + $0x48] sm:$0x30] %v393
        %v398 = vrot.slane %v367, 4
        %v399 = vrot.slane %v370, 5
        %v400 = vor.u32 %v398, %v399
        %v401 = vrot.slane %v375, 4
        %v402 = vrot.slane %v378, 5
        %v403 = vor.u32 %v401, %v402
        %v406 = vld [vmem:[#allocation2 + $0x50] sm:$0x30]
        %v407 = vsel %vm303, %v400, %v406
        %408 = vst [vmem:[#allocation2 + $0x50] sm:$0x30] %v407
        %v409 = vld [vmem:[#allocation2 + $0x58] sm:$0x30]
        %v410 = vsel %vm303, %v403, %v409
        %411 = vst [vmem:[#allocation2 + $0x58] sm:$0x30] %v410
        %v412 = vld [vmem:[%s220 + $0x4] sm:$0xc]
        %v413 = vld [vmem:[%s225 + $0x4] sm:$0xc]
        %v415 = vshrl.u32 %v412, 16
        %v417 = vrot.slane %v415, 1
        %v418 = vshll.u32 %v412, 16
        %v420 = vrot.slane %v418, 2
        %v421 = vor.u32 %v417, %v420
        %v423 = vshrl.u32 %v413, 16
        %v425 = vrot.slane %v423, 1
        %v426 = vshll.u32 %v413, 16
        %v428 = vrot.slane %v426, 2
        %v429 = vor.u32 %v425, %v428
        %v432 = vld [vmem:[#allocation2 + $0x60] sm:$0x7]
        %v433 = vsel %vm332, %v421, %v432
        %434 = vst [vmem:[#allocation2 + $0x60] sm:$0x7] %v433
        %v435 = vld [vmem:[#allocation2 + $0x68] sm:$0x7]
        %v436 = vsel %vm332, %v429, %v435
        %437 = vst [vmem:[#allocation2 + $0x68] sm:$0x7] %v436
        %v440 = vrot.slane %v412, 2
        %v441 = vrot.slane %v413, 2
        %444 = vst [vmem:[#allocation2 + $0x70] sm:$0x3] %v440
        %445 = vst [vmem:[#allocation2 + $0x78] sm:$0x3] %v441
        %v446 = vrot.slane %v415, 2
        %v447 = vrot.slane %v418, 3
        %v448 = vor.u32 %v446, %v447
        %v449 = vrot.slane %v423, 2
        %v450 = vrot.slane %v426, 3
        %v451 = vor.u32 %v449, %v450
        %v454 = vld [vmem:[#allocation2 + $0x80] sm:$0x3]
        %v455 = vsel %vm357, %v448, %v454
        %456 = vst [vmem:[#allocation2 + $0x80] sm:$0x3] %v455
        %v457 = vld [vmem:[#allocation2 + $0x88] sm:$0x3]
        %v458 = vsel %vm357, %v451, %v457
        %459 = vst [vmem:[#allocation2 + $0x88] sm:$0x3] %v458
        %v460 = vld [vmem:[#allocation2] sm:$0xff]
        %v461 = vld [vmem:[#allocation2 + $0x8] sm:$0xff]
        %v462 = vld [vmem:[#allocation2 + $0x10] sm:$0xff]
        %v463 = vld [vmem:[#allocation2 + $0x18] sm:$0xff]
        %v464 = vld [vmem:[#allocation2 + $0x20] sm:$0xff]
        %v465 = vld [vmem:[#allocation2 + $0x28] sm:$0xff]
        %v466 = vld [vmem:[#allocation2 + $0x30] sm:$0xff]
        %v467 = vld [vmem:[#allocation2 + $0x38] sm:$0xff]
        %v468 = vld [vmem:[#allocation2 + $0x40] sm:$0xff]
        %v469 = vld [vmem:[#allocation2 + $0x48] sm:$0xff]
        %v470 = vld [vmem:[#allocation2 + $0x50] sm:$0xff]
        %v471 = vld [vmem:[#allocation2 + $0x58] sm:$0xff]
        %v472 = vld [vmem:[#allocation2 + $0x60] sm:$0xff]
        %v473 = vld [vmem:[#allocation2 + $0x68] sm:$0xff]
        %v474 = vld [vmem:[#allocation2 + $0x70] sm:$0xff]
        %v475 = vld [vmem:[#allocation2 + $0x78] sm:$0xff]
        %v476 = vld [vmem:[#allocation2 + $0x80] sm:$0xff]
        %v477 = vld [vmem:[#allocation2 + $0x88] sm:$0xff]
        %v478 = vld [vmem:[%s2] sm:$0xf]
        %v479 = vld [vmem:[%s2 + $0x4] sm:$0xf]
        %v480 = vld [vmem:[%s2 + $0x8] sm:$0xf]
        %v481 = vld [vmem:[%s2 + $0xc] sm:$0xf]
        %v482 = vld [vmem:[%s2 + $0x10] sm:$0xf]
        %v483 = vld [vmem:[%s2 + $0x14] sm:$0xf]
        %v484 = vld [vmem:[%s2 + $0x18] sm:$0xf]
        %v485 = vld [vmem:[%s2 + $0x1c] sm:$0xf]
        %v486 = vld [vmem:[%s2 + $0x20] sm:$0xf]
        %v487 = vld [vmem:[%s2 + $0x24] sm:$0xf]
        %v488 = vld [vmem:[%s2 + $0x28] sm:$0xf]
        %v489 = vld [vmem:[%s2 + $0x2c] sm:$0xf]
        %v490 = vld [vmem:[%s2 + $0x30] sm:$0xf]
        %v491 = vld [vmem:[%s2 + $0x34] sm:$0xf]
        %v492 = vld [vmem:[%s2 + $0x38] sm:$0xf]
        %v493 = vld [vmem:[%s2 + $0x3c] sm:$0xf]
        %v494 = vld [vmem:[%s2 + $0x40] sm:$0xf]
        %v495 = vld [vmem:[%s2 + $0x44] sm:$0xf]
        %v496 = vld [vmem:[%s2 + $0x48] sm:$0xf]
        %v497 = vld [vmem:[%s2 + $0x4c] sm:$0xf]
        %v498 = vld [vmem:[%s2 + $0x50] sm:$0xf]
        %v499 = vld [vmem:[%s2 + $0x54] sm:$0xf]
        %v500 = vld [vmem:[%s2 + $0x58] sm:$0xf]
        %v501 = vld [vmem:[%s2 + $0x5c] sm:$0xf]
        %v502 = vld [vmem:[%s2 + $0x60] sm:$0xf]
        %v503 = vld [vmem:[%s2 + $0x64] sm:$0xf]
        %v504 = vld [vmem:[%s2 + $0x68] sm:$0xf]
        %v505 = vld [vmem:[%s2 + $0x6c] sm:$0xf]
        %v506 = vld [vmem:[%s2 + $0x70] sm:$0xf]
        %v507 = vld [vmem:[%s2 + $0x74] sm:$0xf]
        %v508 = vld [vmem:[%s2 + $0x78] sm:$0xf]
        %v509 = vld [vmem:[%s2 + $0x7c] sm:$0xf]
        %v510 = vld [vmem:[%s2 + $0x80] sm:$0xf]
        %v511 = vld [vmem:[%s2 + $0x84] sm:$0xf]
        %v512 = vld [vmem:[%s2 + $0x88] sm:$0xf]
        %v513 = vld [vmem:[%s2 + $0x8c] sm:$0xf]
        %v514 = vld [vmem:[%s2 + $0x90] sm:$0xf]
        %v515 = vld [vmem:[%s2 + $0x94] sm:$0xf]
        %v516 = vld [vmem:[%s2 + $0x98] sm:$0xf]
        %v517 = vld [vmem:[%s2 + $0x9c] sm:$0xf]
        %v518 = vld [vmem:[%s2 + $0xa0] sm:$0xf]
        %v519 = vld [vmem:[%s2 + $0xa4] sm:$0xf]
        %v520 = vld [vmem:[%s2 + $0xa8] sm:$0xf]
        %v521 = vld [vmem:[%s2 + $0xac] sm:$0xf]
        %v522 = vld [vmem:[%s2 + $0xb0] sm:$0xf]
        %v523 = vld [vmem:[%s2 + $0xb4] sm:$0xf]
        %v524 = vld [vmem:[%s2 + $0xb8] sm:$0xf]
        %v525 = vld [vmem:[%s2 + $0xbc] sm:$0xf]
        %v526 = vld [vmem:[%s2 + $0xc0] sm:$0xf]
        %v527 = vld [vmem:[%s2 + $0xc4] sm:$0xf]
        %v528 = vld [vmem:[%s2 + $0xc8] sm:$0xf]
        %v529 = vld [vmem:[%s2 + $0xcc] sm:$0xf]
        %v530 = vld [vmem:[%s2 + $0xd0] sm:$0xf]
        %v531 = vld [vmem:[%s2 + $0xd4] sm:$0xf]
        %v532 = vld [vmem:[%s2 + $0xd8] sm:$0xf]
        %v533 = vld [vmem:[%s2 + $0xdc] sm:$0xf]
        %v534 = vld [vmem:[%s2 + $0xe0] sm:$0xf]
        %v535 = vld [vmem:[%s2 + $0xe4] sm:$0xf]
        %v536 = vld [vmem:[%s2 + $0xe8] sm:$0xf]
        %v537 = vld [vmem:[%s2 + $0xec] sm:$0xf]
        %v538 = vld [vmem:[%s2 + $0xf0] sm:$0xf]
        %v539 = vld [vmem:[%s2 + $0xf4] sm:$0xf]
        %v540 = vld [vmem:[%s2 + $0xf8] sm:$0xf]
        %v541 = vld [vmem:[%s2 + $0xfc] sm:$0xf]
        %v542 = vld [vmem:[%s2 + $0x100] sm:$0xf]
        %v543 = vld [vmem:[%s2 + $0x104] sm:$0xf]
        %v544 = vld [vmem:[%s2 + $0x108] sm:$0xf]
        %v545 = vld [vmem:[%s2 + $0x10c] sm:$0xf]
        %v546 = vld [vmem:[%s2 + $0x110] sm:$0xf]
        %v547 = vld [vmem:[%s2 + $0x114] sm:$0xf]
        %v548 = vld [vmem:[%s2 + $0x118] sm:$0xf]
        %v549 = vld [vmem:[%s2 + $0x11c] sm:$0xf]
        %v550 = vld [vmem:[%s2 + $0x120] sm:$0xf]
        %v551 = vld [vmem:[%s2 + $0x124] sm:$0xf]
        %v552 = vld [vmem:[%s2 + $0x128] sm:$0xf]
        %v553 = vld [vmem:[%s2 + $0x12c] sm:$0xf]
        %v554 = vld [vmem:[%s2 + $0x130] sm:$0xf]
        %v555 = vld [vmem:[%s2 + $0x134] sm:$0xf]
        %v556 = vld [vmem:[%s2 + $0x138] sm:$0xf]
        %v557 = vld [vmem:[%s2 + $0x13c] sm:$0xf]
        %v558 = vld [vmem:[%s2 + $0x140] sm:$0xf]
        %v559 = vld [vmem:[%s2 + $0x144] sm:$0xf]
        %v560 = vld [vmem:[%s2 + $0x148] sm:$0xf]
        %v561 = vld [vmem:[%s2 + $0x14c] sm:$0xf]
        %v562 = vld [vmem:[%s2 + $0x150] sm:$0xf]
        %v563 = vld [vmem:[%s2 + $0x154] sm:$0xf]
        %v564 = vld [vmem:[%s2 + $0x158] sm:$0xf]
        %v565 = vld [vmem:[%s2 + $0x15c] sm:$0xf]
        %v566 = vld [vmem:[%s2 + $0x160] sm:$0xf]
        %v567 = vld [vmem:[%s2 + $0x164] sm:$0xf]
        %v568 = vld [vmem:[%s2 + $0x168] sm:$0xf]
        %v569 = vld [vmem:[%s2 + $0x16c] sm:$0xf]
        %v570 = vld [vmem:[%s2 + $0x170] sm:$0xf]
        %v571 = vld [vmem:[%s2 + $0x174] sm:$0xf]
        %v572 = vld [vmem:[%s2 + $0x178] sm:$0xf]
        %v573 = vld [vmem:[%s2 + $0x17c] sm:$0xf]
        %v574 = vld [vmem:[#allocation2] sm:$0xf0]
        %v575 = vld [vmem:[#allocation2 + $0x8] sm:$0xf0]
        %v576 = vld [vmem:[#allocation2 + $0x10] sm:$0xf0]
        %v577 = vld [vmem:[#allocation2 + $0x18] sm:$0xf0]
        %v578 = vld [vmem:[#allocation2 + $0x20] sm:$0xf0]
        %v579 = vld [vmem:[#allocation2 + $0x28] sm:$0xf0]
        %v580 = vld [vmem:[#allocation2 + $0x30] sm:$0xff]
        %v581 = vld [vmem:[#allocation2 + $0x38] sm:$0xff]
        %v582 = vld [vmem:[#allocation2 + $0x40] sm:$0xff]
        %v583 = vld [vmem:[#allocation2 + $0x48] sm:$0xff]
        %v584 = vld [vmem:[#allocation2 + $0x50] sm:$0xff]
        %v585 = vld [vmem:[#allocation2 + $0x58] sm:$0xff]
        %v586 = vld [vmem:[#allocation2 + $0x60] sm:$0xff]
        %v587 = vld [vmem:[#allocation2 + $0x68] sm:$0xff]
        %v588 = vld [vmem:[#allocation2 + $0x70] sm:$0xff]
        %v589 = vld [vmem:[#allocation2 + $0x78] sm:$0xff]
        %v590 = vld [vmem:[#allocation2 + $0x80] sm:$0xff]
        %v591 = vld [vmem:[#allocation2 + $0x88] sm:$0xff]
        %v592 = vld [vmem:[#allocation2 + $0x90] sm:$0xf]
        %v593 = vld [vmem:[#allocation2 + $0x98] sm:$0xf]
        %v594 = vld [vmem:[#allocation2 + $0xa0] sm:$0xf]
        %v595 = vld [vmem:[#allocation2 + $0xa8] sm:$0xf]
        %v596 = vld [vmem:[#allocation2 + $0xb0] sm:$0xf]
        %v597 = vld [vmem:[#allocation2 + $0xb8] sm:$0xf]
        %s598 = scalar_lea.vmem %s2, 384
        %v599 = vld [vmem:[%s598] sm:$0xf]
        %v600 = vld [vmem:[%s598 + $0x4] sm:$0xf]
        %v601 = vld [vmem:[%s598 + $0x8] sm:$0xf]
        %v602 = vld [vmem:[%s598 + $0xc] sm:$0xf]
        %v603 = vld [vmem:[%s598 + $0x10] sm:$0xf]
        %v604 = vld [vmem:[%s598 + $0x14] sm:$0xf]
        %v605 = vld [vmem:[%s598 + $0x18] sm:$0xf]
        %v606 = vld [vmem:[%s598 + $0x1c] sm:$0xf]
        %v607 = vld [vmem:[%s598 + $0x20] sm:$0xf]
        %v608 = vld [vmem:[%s598 + $0x24] sm:$0xf]
        %v609 = vld [vmem:[%s598 + $0x28] sm:$0xf]
        %v610 = vld [vmem:[%s598 + $0x2c] sm:$0xf]
        %v611 = vld [vmem:[%s598 + $0x30] sm:$0xf]
        %v612 = vld [vmem:[%s598 + $0x34] sm:$0xf]
        %v613 = vld [vmem:[%s598 + $0x38] sm:$0xf]
        %v614 = vld [vmem:[%s598 + $0x3c] sm:$0xf]
        %v615 = vld [vmem:[%s598 + $0x40] sm:$0xf]
        %v616 = vld [vmem:[%s598 + $0x44] sm:$0xf]
        %v617 = vld [vmem:[%s598 + $0x48] sm:$0xf]
        %v618 = vld [vmem:[%s598 + $0x4c] sm:$0xf]
        %v619 = vld [vmem:[%s598 + $0x50] sm:$0xf]
        %v620 = vld [vmem:[%s598 + $0x54] sm:$0xf]
        %v621 = vld [vmem:[%s598 + $0x58] sm:$0xf]
        %v622 = vld [vmem:[%s598 + $0x5c] sm:$0xf]
        %v623 = vld [vmem:[%s598 + $0x60] sm:$0xf]
        %v624 = vld [vmem:[%s598 + $0x64] sm:$0xf]
        %v625 = vld [vmem:[%s598 + $0x68] sm:$0xf]
        %v626 = vld [vmem:[%s598 + $0x6c] sm:$0xf]
        %v627 = vld [vmem:[%s598 + $0x70] sm:$0xf]
        %v628 = vld [vmem:[%s598 + $0x74] sm:$0xf]
        %v629 = vld [vmem:[%s598 + $0x78] sm:$0xf]
        %v630 = vld [vmem:[%s598 + $0x7c] sm:$0xf]
        %v631 = vld [vmem:[%s598 + $0x80] sm:$0xf]
        %v632 = vld [vmem:[%s598 + $0x84] sm:$0xf]
        %v633 = vld [vmem:[%s598 + $0x88] sm:$0xf]
        %v634 = vld [vmem:[%s598 + $0x8c] sm:$0xf]
        %v635 = vld [vmem:[%s598 + $0x90] sm:$0xf]
        %v636 = vld [vmem:[%s598 + $0x94] sm:$0xf]
        %v637 = vld [vmem:[%s598 + $0x98] sm:$0xf]
        %v638 = vld [vmem:[%s598 + $0x9c] sm:$0xf]
        %v639 = vld [vmem:[%s598 + $0xa0] sm:$0xf]
        %v640 = vld [vmem:[%s598 + $0xa4] sm:$0xf]
        %v641 = vld [vmem:[%s598 + $0xa8] sm:$0xf]
        %v642 = vld [vmem:[%s598 + $0xac] sm:$0xf]
        %v643 = vld [vmem:[%s598 + $0xb0] sm:$0xf]
        %v644 = vld [vmem:[%s598 + $0xb4] sm:$0xf]
        %v645 = vld [vmem:[%s598 + $0xb8] sm:$0xf]
        %v646 = vld [vmem:[%s598 + $0xbc] sm:$0xf]
        %v647 = vld [vmem:[%s598 + $0xc0] sm:$0xf]
        %v648 = vld [vmem:[%s598 + $0xc4] sm:$0xf]
        %v649 = vld [vmem:[%s598 + $0xc8] sm:$0xf]
        %v650 = vld [vmem:[%s598 + $0xcc] sm:$0xf]
        %v651 = vld [vmem:[%s598 + $0xd0] sm:$0xf]
        %v652 = vld [vmem:[%s598 + $0xd4] sm:$0xf]
        %v653 = vld [vmem:[%s598 + $0xd8] sm:$0xf]
        %v654 = vld [vmem:[%s598 + $0xdc] sm:$0xf]
        %v655 = vld [vmem:[%s598 + $0xe0] sm:$0xf]
        %v656 = vld [vmem:[%s598 + $0xe4] sm:$0xf]
        %v657 = vld [vmem:[%s598 + $0xe8] sm:$0xf]
        %v658 = vld [vmem:[%s598 + $0xec] sm:$0xf]
        %v659 = vld [vmem:[%s598 + $0xf0] sm:$0xf]
        %v660 = vld [vmem:[%s598 + $0xf4] sm:$0xf]
        %v661 = vld [vmem:[%s598 + $0xf8] sm:$0xf]
        %v662 = vld [vmem:[%s598 + $0xfc] sm:$0xf]
        %v663 = vld [vmem:[%s598 + $0x100] sm:$0xf]
        %v664 = vld [vmem:[%s598 + $0x104] sm:$0xf]
        %v665 = vld [vmem:[%s598 + $0x108] sm:$0xf]
        %v666 = vld [vmem:[%s598 + $0x10c] sm:$0xf]
        %v667 = vld [vmem:[%s598 + $0x110] sm:$0xf]
        %v668 = vld [vmem:[%s598 + $0x114] sm:$0xf]
        %v669 = vld [vmem:[%s598 + $0x118] sm:$0xf]
        %v670 = vld [vmem:[%s598 + $0x11c] sm:$0xf]
        %v671 = vld [vmem:[%s598 + $0x120] sm:$0xf]
        %v672 = vld [vmem:[%s598 + $0x124] sm:$0xf]
        %v673 = vld [vmem:[%s598 + $0x128] sm:$0xf]
        %v674 = vld [vmem:[%s598 + $0x12c] sm:$0xf]
        %v675 = vld [vmem:[%s598 + $0x130] sm:$0xf]
        %v676 = vld [vmem:[%s598 + $0x134] sm:$0xf]
        %v677 = vld [vmem:[%s598 + $0x138] sm:$0xf]
        %v678 = vld [vmem:[%s598 + $0x13c] sm:$0xf]
        %v679 = vld [vmem:[%s598 + $0x140] sm:$0xf]
        %v680 = vld [vmem:[%s598 + $0x144] sm:$0xf]
        %v681 = vld [vmem:[%s598 + $0x148] sm:$0xf]
        %v682 = vld [vmem:[%s598 + $0x14c] sm:$0xf]
        %v683 = vld [vmem:[%s598 + $0x150] sm:$0xf]
        %v684 = vld [vmem:[%s598 + $0x154] sm:$0xf]
        %v685 = vld [vmem:[%s598 + $0x158] sm:$0xf]
        %v686 = vld [vmem:[%s598 + $0x15c] sm:$0xf]
        %v687 = vld [vmem:[%s598 + $0x160] sm:$0xf]
        %v688 = vld [vmem:[%s598 + $0x164] sm:$0xf]
        %v689 = vld [vmem:[%s598 + $0x168] sm:$0xf]
        %v690 = vld [vmem:[%s598 + $0x16c] sm:$0xf]
        %v691 = vld [vmem:[%s598 + $0x170] sm:$0xf]
        %v692 = vld [vmem:[%s598 + $0x174] sm:$0xf]
        %v693 = vld [vmem:[%s598 + $0x178] sm:$0xf]
        %v694 = vld [vmem:[%s598 + $0x17c] sm:$0xf]
        %vm719 = vcmask 1043456
        %v720 = vrot.slane %v574, 4
        %v721 = vrot.slane %v580, 4
        %v722 = vsel %vm719, %v720, %v721
        %v723 = vrot.slane %v575, 4
        %v724 = vrot.slane %v581, 4
        %v725 = vsel %vm719, %v723, %v724
        %v726 = vrot.slane %v576, 4
        %v727 = vrot.slane %v582, 4
        %v728 = vsel %vm719, %v726, %v727
        %v729 = vrot.slane %v577, 4
        %v730 = vrot.slane %v583, 4
        %v731 = vsel %vm719, %v729, %v730
        %v732 = vrot.slane %v578, 4
        %v733 = vrot.slane %v584, 4
        %v734 = vsel %vm719, %v732, %v733
        %v735 = vrot.slane %v579, 4
        %v736 = vrot.slane %v585, 4
        %v737 = vsel %vm719, %v735, %v736
        %v738 = vrot.slane %v586, 4
        %v739 = vsel %vm719, %v721, %v738
        %v740 = vrot.slane %v587, 4
        %v741 = vsel %vm719, %v724, %v740
        %v742 = vrot.slane %v588, 4
        %v743 = vsel %vm719, %v727, %v742
        %v744 = vrot.slane %v589, 4
        %v745 = vsel %vm719, %v730, %v744
        %v746 = vrot.slane %v590, 4
        %v747 = vsel %vm719, %v733, %v746
        %v748 = vrot.slane %v591, 4
        %v749 = vsel %vm719, %v736, %v748
        %v750 = vrot.slane %v592, 4
        %v751 = vsel %vm719, %v738, %v750
        %v752 = vrot.slane %v593, 4
        %v753 = vsel %vm719, %v740, %v752
        %v754 = vrot.slane %v594, 4
        %v755 = vsel %vm719, %v742, %v754
        %v756 = vrot.slane %v595, 4
        %v757 = vsel %vm719, %v744, %v756
        %v758 = vrot.slane %v596, 4
        %v759 = vsel %vm719, %v746, %v758
        %v760 = vrot.slane %v597, 4
        %v761 = vsel %vm719, %v748, %v760
        %v876 = vunpack.c.l.b16 %v599
        %v877 = vunpack.c.l.b16 %v600
        %v878 = vunpack.c.l.b16 %v601
        %v879 = vunpack.c.l.b16 %v602
        %v880 = vunpack.c.l.b16 %v603
        %v881 = vunpack.c.l.b16 %v604
        %v882 = vunpack.c.l.b16 %v605
        %v883 = vunpack.c.l.b16 %v606
        %v884 = vunpack.c.l.b16 %v607
        %v885 = vunpack.c.l.b16 %v608
        %v886 = vunpack.c.l.b16 %v609
        %v887 = vunpack.c.l.b16 %v610
        %v888 = vunpack.c.l.b16 %v611
        %v889 = vunpack.c.l.b16 %v612
        %v890 = vunpack.c.l.b16 %v613
        %v891 = vunpack.c.l.b16 %v614
        %v892 = vunpack.c.l.b16 %v615
        %v893 = vunpack.c.l.b16 %v616
        %v894 = vunpack.c.l.b16 %v617
        %v895 = vunpack.c.l.b16 %v618
        %v896 = vunpack.c.l.b16 %v619
        %v897 = vunpack.c.l.b16 %v620
        %v898 = vunpack.c.l.b16 %v621
        %v899 = vunpack.c.l.b16 %v622
        %v900 = vunpack.c.l.b16 %v623
        %v901 = vunpack.c.l.b16 %v624
        %v902 = vunpack.c.l.b16 %v625
        %v903 = vunpack.c.l.b16 %v626
        %v904 = vunpack.c.l.b16 %v627
        %v905 = vunpack.c.l.b16 %v628
        %v906 = vunpack.c.l.b16 %v629
        %v907 = vunpack.c.l.b16 %v630
        %v908 = vunpack.c.l.b16 %v631
        %v909 = vunpack.c.l.b16 %v632
        %v910 = vunpack.c.l.b16 %v633
        %v911 = vunpack.c.l.b16 %v634
        %v912 = vunpack.c.l.b16 %v635
        %v913 = vunpack.c.l.b16 %v636
        %v914 = vunpack.c.l.b16 %v637
        %v915 = vunpack.c.l.b16 %v638
        %v916 = vunpack.c.l.b16 %v639
        %v917 = vunpack.c.l.b16 %v640
        %v918 = vunpack.c.l.b16 %v641
        %v919 = vunpack.c.l.b16 %v642
        %v920 = vunpack.c.l.b16 %v643
        %v921 = vunpack.c.l.b16 %v644
        %v922 = vunpack.c.l.b16 %v645
        %v923 = vunpack.c.l.b16 %v646
        %v924 = vunpack.c.l.b16 %v647
        %v925 = vunpack.c.l.b16 %v648
        %v926 = vunpack.c.l.b16 %v649
        %v927 = vunpack.c.l.b16 %v650
        %v928 = vunpack.c.l.b16 %v651
        %v929 = vunpack.c.l.b16 %v652
        %v930 = vunpack.c.l.b16 %v653
        %v931 = vunpack.c.l.b16 %v654
        %v932 = vunpack.c.l.b16 %v655
        %v933 = vunpack.c.l.b16 %v656
        %v934 = vunpack.c.l.b16 %v657
        %v935 = vunpack.c.l.b16 %v658
        %v936 = vunpack.c.l.b16 %v659
        %v937 = vunpack.c.l.b16 %v660
        %v938 = vunpack.c.l.b16 %v661
        %v939 = vunpack.c.l.b16 %v662
        %v940 = vunpack.c.l.b16 %v663
        %v941 = vunpack.c.l.b16 %v664
        %v942 = vunpack.c.l.b16 %v665
        %v943 = vunpack.c.l.b16 %v666
        %v944 = vunpack.c.l.b16 %v667
        %v945 = vunpack.c.l.b16 %v668
        %v946 = vunpack.c.l.b16 %v669
        %v947 = vunpack.c.l.b16 %v670
        %v948 = vunpack.c.l.b16 %v671
        %v949 = vunpack.c.l.b16 %v672
        %v950 = vunpack.c.l.b16 %v673
        %v951 = vunpack.c.l.b16 %v674
        %v952 = vunpack.c.l.b16 %v675
        %v953 = vunpack.c.l.b16 %v676
        %v954 = vunpack.c.l.b16 %v677
        %v955 = vunpack.c.l.b16 %v678
        %v956 = vunpack.c.l.b16 %v679
        %v957 = vunpack.c.l.b16 %v680
        %v958 = vunpack.c.l.b16 %v681
        %v959 = vunpack.c.l.b16 %v682
        %v960 = vunpack.c.l.b16 %v683
        %v961 = vunpack.c.l.b16 %v684
        %v962 = vunpack.c.l.b16 %v685
        %v963 = vunpack.c.l.b16 %v686
        %v964 = vunpack.c.l.b16 %v687
        %v965 = vunpack.c.l.b16 %v688
        %v966 = vunpack.c.l.b16 %v689
        %v967 = vunpack.c.l.b16 %v690
        %v968 = vunpack.c.l.b16 %v691
        %v969 = vunpack.c.l.b16 %v692
        %v970 = vunpack.c.l.b16 %v693
        %v971 = vunpack.c.l.b16 %v694
        %v972 = vpack.c.b16 %v877, %v876
        %v973 = vpack.c.b16 %v879, %v878
        %v974 = vpack.c.b16 %v881, %v880
        %v975 = vpack.c.b16 %v883, %v882
        %v976 = vpack.c.b16 %v885, %v884
        %v977 = vpack.c.b16 %v887, %v886
        %v978 = vpack.c.b16 %v889, %v888
        %v979 = vpack.c.b16 %v891, %v890
        %v980 = vpack.c.b16 %v893, %v892
        %v981 = vpack.c.b16 %v895, %v894
        %v982 = vpack.c.b16 %v897, %v896
        %v983 = vpack.c.b16 %v899, %v898
        %v984 = vpack.c.b16 %v901, %v900
        %v985 = vpack.c.b16 %v903, %v902
        %v986 = vpack.c.b16 %v905, %v904
        %v987 = vpack.c.b16 %v907, %v906
        %v988 = vpack.c.b16 %v909, %v908
        %v989 = vpack.c.b16 %v911, %v910
        %v990 = vpack.c.b16 %v913, %v912
        %v991 = vpack.c.b16 %v915, %v914
        %v992 = vpack.c.b16 %v917, %v916
        %v993 = vpack.c.b16 %v919, %v918
        %v994 = vpack.c.b16 %v921, %v920
        %v995 = vpack.c.b16 %v923, %v922
        %v996 = vpack.c.b16 %v925, %v924
        %v997 = vpack.c.b16 %v927, %v926
        %v998 = vpack.c.b16 %v929, %v928
        %v999 = vpack.c.b16 %v931, %v930
        %v1000 = vpack.c.b16 %v933, %v932
        %v1001 = vpack.c.b16 %v935, %v934
        %v1002 = vpack.c.b16 %v937, %v936
        %v1003 = vpack.c.b16 %v939, %v938
        %v1004 = vpack.c.b16 %v941, %v940
        %v1005 = vpack.c.b16 %v943, %v942
        %v1006 = vpack.c.b16 %v945, %v944
        %v1007 = vpack.c.b16 %v947, %v946
        %v1008 = vpack.c.b16 %v949, %v948
        %v1009 = vpack.c.b16 %v951, %v950
        %v1010 = vpack.c.b16 %v953, %v952
        %v1011 = vpack.c.b16 %v955, %v954
        %v1012 = vpack.c.b16 %v957, %v956
        %v1013 = vpack.c.b16 %v959, %v958
        %v1014 = vpack.c.b16 %v961, %v960
        %v1015 = vpack.c.b16 %v963, %v962
        %v1016 = vpack.c.b16 %v965, %v964
        %v1017 = vpack.c.b16 %v967, %v966
        %v1018 = vpack.c.b16 %v969, %v968
        %v1019 = vpack.c.b16 %v971, %v970
        %1068 = vmatprep.subr.bf16.mxu0 0
        %1069 = vmatpush1.bf16.msra.mxu0 %v972
        %1070 = vmatprep.subr.bf16.mxu0 0
        %1071 = vmatpush1.bf16.msra.mxu0 %v973
        %1072 = vmatprep.subr.bf16.mxu0 0
        %1073 = vmatpush1.bf16.msra.mxu0 %v974
        %1074 = vmatprep.subr.bf16.mxu0 0
        %1075 = vmatpush1.bf16.msra.mxu0 %v975
        %1076 = vmatprep.subr.bf16.mxu0 0
        %1077 = vmatpush1.bf16.msra.mxu0 %v976
        %1078 = vmatprep.subr.bf16.mxu0 0
        %1079 = vmatpush1.bf16.msra.mxu0 %v977
        %1080 = vmatprep.subr.bf16.mxu0 0
        %1081 = vmatpush1.bf16.msra.mxu0 %v978
        %1082 = vmatprep.subr.bf16.mxu0 0
        %1083 = vmatpush1.bf16.msra.mxu0 %v979
        %1084 = vmatprep.subr.bf16.mxu0 0
        %1085 = vmatpush1.bf16.msra.mxu0 %v980
        %1086 = vmatprep.subr.bf16.mxu0 0
        %1087 = vmatpush1.bf16.msra.mxu0 %v981
        %1088 = vmatprep.subr.bf16.mxu0 0
        %1089 = vmatpush1.bf16.msra.mxu0 %v982
        %1090 = vmatprep.subr.bf16.mxu0 0
        %1091 = vmatpush1.bf16.msra.mxu0 %v983
        %1092 = vmatprep.subr.bf16.mxu0 0
        %1093 = vmatpush1.bf16.msra.mxu0 %v984
        %1094 = vmatprep.subr.bf16.mxu0 0
        %1095 = vmatpush1.bf16.msra.mxu0 %v985
        %1096 = vmatprep.subr.bf16.mxu0 0
        %1097 = vmatpush1.bf16.msra.mxu0 %v986
        %1098 = vmatprep.subr.bf16.mxu0 0
        %1099 = vmatpush1.bf16.msra.mxu0 %v987
        %1100 = vmatprep.mubr.bf16.mxu0 %v725
        %1101 = vmatmul.mubr.bf16.gmra.mrb[0].mxu0 %v722
        %v1102 = vpop.f32.mrb[0].mxu0
        %v1103 = vadd.f32 0.0, %v1102
        %v1104 = vpop.f32.mrb[0].mxu0
        %v1105 = vpop.f32.mrb[0].mxu0
        %v1106 = vadd.f32 0.0, %v1105
        %v1107 = vpop.f32.mrb[0].mxu0
        %1108 = vmatprep.mubr.bf16.mxu0 %v741
        %1109 = vmatmul.mubr.bf16.gmra.mrb[0].mxu0 %v739
        %v1110 = vpop.f32.mrb[0].mxu0
        %v1111 = vadd.f32 0.0, %v1110
        %v1112 = vpop.f32.mrb[0].mxu0
        %v1113 = vpop.f32.mrb[0].mxu0
        %v1114 = vadd.f32 0.0, %v1113
        %v1115 = vpop.f32.mrb[0].mxu0
        %1116 = vmatprep.mubr.bf16.mxu0 %v753
        %1117 = vmatmul.mubr.bf16.gmra.mrb[0].mxu0 %v751
        %v1118 = vpop.f32.mrb[0].mxu0
        %v1119 = vadd.f32 0.0, %v1118
        %v1120 = vpop.f32.mrb[0].mxu0
        %v1121 = vpop.f32.mrb[0].mxu0
        %v1122 = vadd.f32 0.0, %v1121
        %v1123 = vpop.f32.mrb[0].mxu0
        %1124 = vdwg.mxu0
        %1125 = vmatprep.subr.bf16.mxu0 0
        %1126 = vmatpush1.bf16.msra.mxu0 %v988
        %1127 = vmatprep.subr.bf16.mxu0 0
        %1128 = vmatpush1.bf16.msra.mxu0 %v989
        %1129 = vmatprep.subr.bf16.mxu0 0
        %1130 = vmatpush1.bf16.msra.mxu0 %v990
        %1131 = vmatprep.subr.bf16.mxu0 0
        %1132 = vmatpush1.bf16.msra.mxu0 %v991
        %1133 = vmatprep.subr.bf16.mxu0 0
        %1134 = vmatpush1.bf16.msra.mxu0 %v992
        %1135 = vmatprep.subr.bf16.mxu0 0
        %1136 = vmatpush1.bf16.msra.mxu0 %v993
        %1137 = vmatprep.subr.bf16.mxu0 0
        %1138 = vmatpush1.bf16.msra.mxu0 %v994
        %1139 = vmatprep.subr.bf16.mxu0 0
        %1140 = vmatpush1.bf16.msra.mxu0 %v995
        %1141 = vmatprep.subr.bf16.mxu0 0
        %1142 = vmatpush1.bf16.msra.mxu0 %v996
        %1143 = vmatprep.subr.bf16.mxu0 0
        %1144 = vmatpush1.bf16.msra.mxu0 %v997
        %1145 = vmatprep.subr.bf16.mxu0 0
        %1146 = vmatpush1.bf16.msra.mxu0 %v998
        %1147 = vmatprep.subr.bf16.mxu0 0
        %1148 = vmatpush1.bf16.msra.mxu0 %v999
        %1149 = vmatprep.subr.bf16.mxu0 0
        %1150 = vmatpush1.bf16.msra.mxu0 %v1000
        %1151 = vmatprep.subr.bf16.mxu0 0
        %1152 = vmatpush1.bf16.msra.mxu0 %v1001
        %1153 = vmatprep.subr.bf16.mxu0 0
        %1154 = vmatpush1.bf16.msra.mxu0 %v1002
        %1155 = vmatprep.subr.bf16.mxu0 0
        %1156 = vmatpush1.bf16.msra.mxu0 %v1003
        %1157 = vmatprep.mubr.bf16.mxu0 %v731
        %1158 = vmatmul.mubr.bf16.gmra.mrb[0].mxu0 %v728
        %v1159 = vpop.f32.mrb[0].mxu0
        %v1160 = vadd.f32 %v1103, %v1159
        %v1161 = vpop.f32.mrb[0].mxu0
        %v1162 = vpop.f32.mrb[0].mxu0
        %v1163 = vadd.f32 %v1106, %v1162
        %v1164 = vpop.f32.mrb[0].mxu0
        %1165 = vmatprep.mubr.bf16.mxu0 %v745
        %1166 = vmatmul.mubr.bf16.gmra.mrb[0].mxu0 %v743
        %v1167 = vpop.f32.mrb[0].mxu0
        %v1168 = vadd.f32 %v1111, %v1167
        %v1169 = vpop.f32.mrb[0].mxu0
        %v1170 = vpop.f32.mrb[0].mxu0
        %v1171 = vadd.f32 %v1114, %v1170
        %v1172 = vpop.f32.mrb[0].mxu0
        %1173 = vmatprep.mubr.bf16.mxu0 %v757
        %1174 = vmatmul.mubr.bf16.gmra.mrb[0].mxu0 %v755
        %v1175 = vpop.f32.mrb[0].mxu0
        %v1176 = vadd.f32 %v1119, %v1175
        %v1177 = vpop.f32.mrb[0].mxu0
        %v1178 = vpop.f32.mrb[0].mxu0
        %v1179 = vadd.f32 %v1122, %v1178
        %v1180 = vpop.f32.mrb[0].mxu0
        %1181 = vdwg.mxu0
        %1182 = vmatprep.subr.bf16.mxu0 0
        %1183 = vmatpush1.bf16.msra.mxu0 %v1004
        %1184 = vmatprep.subr.bf16.mxu0 0
        %1185 = vmatpush1.bf16.msra.mxu0 %v1005
        %1186 = vmatprep.subr.bf16.mxu0 0
        %1187 = vmatpush1.bf16.msra.mxu0 %v1006
        %1188 = vmatprep.subr.bf16.mxu0 0
        %1189 = vmatpush1.bf16.msra.mxu0 %v1007
        %1190 = vmatprep.subr.bf16.mxu0 0
        %1191 = vmatpush1.bf16.msra.mxu0 %v1008
        %1192 = vmatprep.subr.bf16.mxu0 0
        %1193 = vmatpush1.bf16.msra.mxu0 %v1009
        %1194 = vmatprep.subr.bf16.mxu0 0
        %1195 = vmatpush1.bf16.msra.mxu0 %v1010
        %1196 = vmatprep.subr.bf16.mxu0 0
        %1197 = vmatpush1.bf16.msra.mxu0 %v1011
        %1198 = vmatprep.subr.bf16.mxu0 0
        %1199 = vmatpush1.bf16.msra.mxu0 %v1012
        %1200 = vmatprep.subr.bf16.mxu0 0
        %1201 = vmatpush1.bf16.msra.mxu0 %v1013
        %1202 = vmatprep.subr.bf16.mxu0 0
        %1203 = vmatpush1.bf16.msra.mxu0 %v1014
        %1204 = vmatprep.subr.bf16.mxu0 0
        %1205 = vmatpush1.bf16.msra.mxu0 %v1015
        %1206 = vmatprep.subr.bf16.mxu0 0
        %1207 = vmatpush1.bf16.msra.mxu0 %v1016
        %1208 = vmatprep.subr.bf16.mxu0 0
        %1209 = vmatpush1.bf16.msra.mxu0 %v1017
        %1210 = vmatprep.subr.bf16.mxu0 0
        %1211 = vmatpush1.bf16.msra.mxu0 %v1018
        %1212 = vmatprep.subr.bf16.mxu0 0
        %1213 = vmatpush1.bf16.msra.mxu0 %v1019
        %1214 = vmatprep.mubr.bf16.mxu0 %v737
        %1215 = vmatmul.mubr.bf16.gmra.mrb[0].mxu0 %v734
        %v1216 = vpop.f32.mrb[0].mxu0
        %v1217 = vadd.f32 %v1160, %v1216
        %v1218 = vpop.f32.mrb[0].mxu0
        %v1219 = vpop.f32.mrb[0].mxu0
        %v1220 = vadd.f32 %v1163, %v1219
        %v1221 = vpop.f32.mrb[0].mxu0
        %1222 = vmatprep.mubr.bf16.mxu0 %v749
        %1223 = vmatmul.mubr.bf16.gmra.mrb[0].mxu0 %v747
        %v1224 = vpop.f32.mrb[0].mxu0
        %v1225 = vadd.f32 %v1168, %v1224
        %v1226 = vpop.f32.mrb[0].mxu0
        %v1227 = vpop.f32.mrb[0].mxu0
        %v1228 = vadd.f32 %v1171, %v1227
        %v1229 = vpop.f32.mrb[0].mxu0
        %1230 = vmatprep.mubr.bf16.mxu0 %v761
        %1231 = vmatmul.mubr.bf16.gmra.mrb[0].mxu0 %v759
        %v1232 = vpop.f32.mrb[0].mxu0
        %v1233 = vadd.f32 %v1176, %v1232
        %v1234 = vpop.f32.mrb[0].mxu0
        %v1235 = vpop.f32.mrb[0].mxu0
        %v1236 = vadd.f32 %v1179, %v1235
        %v1237 = vpop.f32.mrb[0].mxu0
        %1238 = vdwg.mxu0
        %v1335 = vunpack.c.l.b16 %v478
        %v1336 = vunpack.c.l.b16 %v479
        %v1337 = vunpack.c.l.b16 %v480
        %v1338 = vunpack.c.l.b16 %v481
        %v1339 = vunpack.c.l.b16 %v482
        %v1340 = vunpack.c.l.b16 %v483
        %v1341 = vunpack.c.l.b16 %v484
        %v1342 = vunpack.c.l.b16 %v485
        %v1343 = vunpack.c.l.b16 %v486
        %v1344 = vunpack.c.l.b16 %v487
        %v1345 = vunpack.c.l.b16 %v488
        %v1346 = vunpack.c.l.b16 %v489
        %v1347 = vunpack.c.l.b16 %v490
        %v1348 = vunpack.c.l.b16 %v491
        %v1349 = vunpack.c.l.b16 %v492
        %v1350 = vunpack.c.l.b16 %v493
        %v1351 = vunpack.c.l.b16 %v494
        %v1352 = vunpack.c.l.b16 %v495
        %v1353 = vunpack.c.l.b16 %v496
        %v1354 = vunpack.c.l.b16 %v497
        %v1355 = vunpack.c.l.b16 %v498
        %v1356 = vunpack.c.l.b16 %v499
        %v1357 = vunpack.c.l.b16 %v500
        %v1358 = vunpack.c.l.b16 %v501
        %v1359 = vunpack.c.l.b16 %v502
        %v1360 = vunpack.c.l.b16 %v503
        %v1361 = vunpack.c.l.b16 %v504
        %v1362 = vunpack.c.l.b16 %v505
        %v1363 = vunpack.c.l.b16 %v506
        %v1364 = vunpack.c.l.b16 %v507
        %v1365 = vunpack.c.l.b16 %v508
        %v1366 = vunpack.c.l.b16 %v509
        %v1367 = vunpack.c.l.b16 %v510
        %v1368 = vunpack.c.l.b16 %v511
        %v1369 = vunpack.c.l.b16 %v512
        %v1370 = vunpack.c.l.b16 %v513
        %v1371 = vunpack.c.l.b16 %v514
        %v1372 = vunpack.c.l.b16 %v515
        %v1373 = vunpack.c.l.b16 %v516
        %v1374 = vunpack.c.l.b16 %v517
        %v1375 = vunpack.c.l.b16 %v518
        %v1376 = vunpack.c.l.b16 %v519
        %v1377 = vunpack.c.l.b16 %v520
        %v1378 = vunpack.c.l.b16 %v521
        %v1379 = vunpack.c.l.b16 %v522
        %v1380 = vunpack.c.l.b16 %v523
        %v1381 = vunpack.c.l.b16 %v524
        %v1382 = vunpack.c.l.b16 %v525
        %v1383 = vunpack.c.l.b16 %v526
        %v1384 = vunpack.c.l.b16 %v527
        %v1385 = vunpack.c.l.b16 %v528
        %v1386 = vunpack.c.l.b16 %v529
        %v1387 = vunpack.c.l.b16 %v530
        %v1388 = vunpack.c.l.b16 %v531
        %v1389 = vunpack.c.l.b16 %v532
        %v1390 = vunpack.c.l.b16 %v533
        %v1391 = vunpack.c.l.b16 %v534
        %v1392 = vunpack.c.l.b16 %v535
        %v1393 = vunpack.c.l.b16 %v536
        %v1394 = vunpack.c.l.b16 %v537
        %v1395 = vunpack.c.l.b16 %v538
        %v1396 = vunpack.c.l.b16 %v539
        %v1397 = vunpack.c.l.b16 %v540
        %v1398 = vunpack.c.l.b16 %v541
        %v1399 = vunpack.c.l.b16 %v542
        %v1400 = vunpack.c.l.b16 %v543
        %v1401 = vunpack.c.l.b16 %v544
        %v1402 = vunpack.c.l.b16 %v545
        %v1403 = vunpack.c.l.b16 %v546
        %v1404 = vunpack.c.l.b16 %v547
        %v1405 = vunpack.c.l.b16 %v548
        %v1406 = vunpack.c.l.b16 %v549
        %v1407 = vunpack.c.l.b16 %v550
        %v1408 = vunpack.c.l.b16 %v551
        %v1409 = vunpack.c.l.b16 %v552
        %v1410 = vunpack.c.l.b16 %v553
        %v1411 = vunpack.c.l.b16 %v554
        %v1412 = vunpack.c.l.b16 %v555
        %v1413 = vunpack.c.l.b16 %v556
        %v1414 = vunpack.c.l.b16 %v557
        %v1415 = vunpack.c.l.b16 %v558
        %v1416 = vunpack.c.l.b16 %v559
        %v1417 = vunpack.c.l.b16 %v560
        %v1418 = vunpack.c.l.b16 %v561
        %v1419 = vunpack.c.l.b16 %v562
        %v1420 = vunpack.c.l.b16 %v563
        %v1421 = vunpack.c.l.b16 %v564
        %v1422 = vunpack.c.l.b16 %v565
        %v1423 = vunpack.c.l.b16 %v566
        %v1424 = vunpack.c.l.b16 %v567
        %v1425 = vunpack.c.l.b16 %v568
        %v1426 = vunpack.c.l.b16 %v569
        %v1427 = vunpack.c.l.b16 %v570
        %v1428 = vunpack.c.l.b16 %v571
        %v1429 = vunpack.c.l.b16 %v572
        %v1430 = vunpack.c.l.b16 %v573
        %v1431 = vpack.c.b16 %v1336, %v1335
        %v1432 = vpack.c.b16 %v1338, %v1337
        %v1433 = vpack.c.b16 %v1340, %v1339
        %v1434 = vpack.c.b16 %v1342, %v1341
        %v1435 = vpack.c.b16 %v1344, %v1343
        %v1436 = vpack.c.b16 %v1346, %v1345
        %v1437 = vpack.c.b16 %v1348, %v1347
        %v1438 = vpack.c.b16 %v1350, %v1349
        %v1439 = vpack.c.b16 %v1352, %v1351
        %v1440 = vpack.c.b16 %v1354, %v1353
        %v1441 = vpack.c.b16 %v1356, %v1355
        %v1442 = vpack.c.b16 %v1358, %v1357
        %v1443 = vpack.c.b16 %v1360, %v1359
        %v1444 = vpack.c.b16 %v1362, %v1361
        %v1445 = vpack.c.b16 %v1364, %v1363
        %v1446 = vpack.c.b16 %v1366, %v1365
        %v1447 = vpack.c.b16 %v1368, %v1367
        %v1448 = vpack.c.b16 %v1370, %v1369
        %v1449 = vpack.c.b16 %v1372, %v1371
        %v1450 = vpack.c.b16 %v1374, %v1373
        %v1451 = vpack.c.b16 %v1376, %v1375
        %v1452 = vpack.c.b16 %v1378, %v1377
        %v1453 = vpack.c.b16 %v1380, %v1379
        %v1454 = vpack.c.b16 %v1382, %v1381
        %v1455 = vpack.c.b16 %v1384, %v1383
        %v1456 = vpack.c.b16 %v1386, %v1385
        %v1457 = vpack.c.b16 %v1388, %v1387
        %v1458 = vpack.c.b16 %v1390, %v1389
        %v1459 = vpack.c.b16 %v1392, %v1391
        %v1460 = vpack.c.b16 %v1394, %v1393
        %v1461 = vpack.c.b16 %v1396, %v1395
        %v1462 = vpack.c.b16 %v1398, %v1397
        %v1463 = vpack.c.b16 %v1400, %v1399
        %v1464 = vpack.c.b16 %v1402, %v1401
        %v1465 = vpack.c.b16 %v1404, %v1403
        %v1466 = vpack.c.b16 %v1406, %v1405
        %v1467 = vpack.c.b16 %v1408, %v1407
        %v1468 = vpack.c.b16 %v1410, %v1409
        %v1469 = vpack.c.b16 %v1412, %v1411
        %v1470 = vpack.c.b16 %v1414, %v1413
        %v1471 = vpack.c.b16 %v1416, %v1415
        %v1472 = vpack.c.b16 %v1418, %v1417
        %v1473 = vpack.c.b16 %v1420, %v1419
        %v1474 = vpack.c.b16 %v1422, %v1421
        %v1475 = vpack.c.b16 %v1424, %v1423
        %v1476 = vpack.c.b16 %v1426, %v1425
        %v1477 = vpack.c.b16 %v1428, %v1427
        %v1478 = vpack.c.b16 %v1430, %v1429
        %1527 = vmatprep.subr.bf16.mxu0 0
        %1528 = vmatpush1.bf16.msra.mxu0 %v1431
        %1529 = vmatprep.subr.bf16.mxu0 0
        %1530 = vmatpush1.bf16.msra.mxu0 %v1432
        %1531 = vmatprep.subr.bf16.mxu0 0
        %1532 = vmatpush1.bf16.msra.mxu0 %v1433
        %1533 = vmatprep.subr.bf16.mxu0 0
        %1534 = vmatpush1.bf16.msra.mxu0 %v1434
        %1535 = vmatprep.subr.bf16.mxu0 0
        %1536 = vmatpush1.bf16.msra.mxu0 %v1435
        %1537 = vmatprep.subr.bf16.mxu0 0
        %1538 = vmatpush1.bf16.msra.mxu0 %v1436
        %1539 = vmatprep.subr.bf16.mxu0 0
        %1540 = vmatpush1.bf16.msra.mxu0 %v1437
        %1541 = vmatprep.subr.bf16.mxu0 0
        %1542 = vmatpush1.bf16.msra.mxu0 %v1438
        %1543 = vmatprep.subr.bf16.mxu0 0
        %1544 = vmatpush1.bf16.msra.mxu0 %v1439
        %1545 = vmatprep.subr.bf16.mxu0 0
        %1546 = vmatpush1.bf16.msra.mxu0 %v1440
        %1547 = vmatprep.subr.bf16.mxu0 0
        %1548 = vmatpush1.bf16.msra.mxu0 %v1441
        %1549 = vmatprep.subr.bf16.mxu0 0
        %1550 = vmatpush1.bf16.msra.mxu0 %v1442
        %1551 = vmatprep.subr.bf16.mxu0 0
        %1552 = vmatpush1.bf16.msra.mxu0 %v1443
        %1553 = vmatprep.subr.bf16.mxu0 0
        %1554 = vmatpush1.bf16.msra.mxu0 %v1444
        %1555 = vmatprep.subr.bf16.mxu0 0
        %1556 = vmatpush1.bf16.msra.mxu0 %v1445
        %1557 = vmatprep.subr.bf16.mxu0 0
        %1558 = vmatpush1.bf16.msra.mxu0 %v1446
        %1559 = vmatprep.mubr.bf16.mxu0 %v461
        %1560 = vmatmul.mubr.bf16.gmra.mrb[0].mxu0 %v460
        %v1561 = vpop.f32.mrb[0].mxu0
        %v1562 = vadd.f32 %v1217, %v1561
        %v1563 = vpop.f32.mrb[0].mxu0
        %v1564 = vpop.f32.mrb[0].mxu0
        %v1565 = vadd.f32 %v1220, %v1564
        %v1566 = vpop.f32.mrb[0].mxu0
        %1567 = vmatprep.mubr.bf16.mxu0 %v467
        %1568 = vmatmul.mubr.bf16.gmra.mrb[0].mxu0 %v466
        %v1569 = vpop.f32.mrb[0].mxu0
        %v1570 = vadd.f32 %v1225, %v1569
        %v1571 = vpop.f32.mrb[0].mxu0
        %v1572 = vpop.f32.mrb[0].mxu0
        %v1573 = vadd.f32 %v1228, %v1572
        %v1574 = vpop.f32.mrb[0].mxu0
        %1575 = vmatprep.mubr.bf16.mxu0 %v473
        %1576 = vmatmul.mubr.bf16.gmra.mrb[0].mxu0 %v472
        %v1577 = vpop.f32.mrb[0].mxu0
        %v1578 = vadd.f32 %v1233, %v1577
        %v1579 = vpop.f32.mrb[0].mxu0
        %v1580 = vpop.f32.mrb[0].mxu0
        %v1581 = vadd.f32 %v1236, %v1580
        %v1582 = vpop.f32.mrb[0].mxu0
        %1583 = vdwg.mxu0
        %1584 = vmatprep.subr.bf16.mxu0 0
        %1585 = vmatpush1.bf16.msra.mxu0 %v1447
        %1586 = vmatprep.subr.bf16.mxu0 0
        %1587 = vmatpush1.bf16.msra.mxu0 %v1448
        %1588 = vmatprep.subr.bf16.mxu0 0
        %1589 = vmatpush1.bf16.msra.mxu0 %v1449
        %1590 = vmatprep.subr.bf16.mxu0 0
        %1591 = vmatpush1.bf16.msra.mxu0 %v1450
        %1592 = vmatprep.subr.bf16.mxu0 0
        %1593 = vmatpush1.bf16.msra.mxu0 %v1451
        %1594 = vmatprep.subr.bf16.mxu0 0
        %1595 = vmatpush1.bf16.msra.mxu0 %v1452
        %1596 = vmatprep.subr.bf16.mxu0 0
        %1597 = vmatpush1.bf16.msra.mxu0 %v1453
        %1598 = vmatprep.subr.bf16.mxu0 0
        %1599 = vmatpush1.bf16.msra.mxu0 %v1454
        %1600 = vmatprep.subr.bf16.mxu0 0
        %1601 = vmatpush1.bf16.msra.mxu0 %v1455
        %1602 = vmatprep.subr.bf16.mxu0 0
        %1603 = vmatpush1.bf16.msra.mxu0 %v1456
        %1604 = vmatprep.subr.bf16.mxu0 0
        %1605 = vmatpush1.bf16.msra.mxu0 %v1457
        %1606 = vmatprep.subr.bf16.mxu0 0
        %1607 = vmatpush1.bf16.msra.mxu0 %v1458
        %1608 = vmatprep.subr.bf16.mxu0 0
        %1609 = vmatpush1.bf16.msra.mxu0 %v1459
        %1610 = vmatprep.subr.bf16.mxu0 0
        %1611 = vmatpush1.bf16.msra.mxu0 %v1460
        %1612 = vmatprep.subr.bf16.mxu0 0
        %1613 = vmatpush1.bf16.msra.mxu0 %v1461
        %1614 = vmatprep.subr.bf16.mxu0 0
        %1615 = vmatpush1.bf16.msra.mxu0 %v1462
        %1616 = vmatprep.mubr.bf16.mxu0 %v463
        %1617 = vmatmul.mubr.bf16.gmra.mrb[0].mxu0 %v462
        %v1618 = vpop.f32.mrb[0].mxu0
        %v1619 = vadd.f32 %v1562, %v1618
        %v1620 = vpop.f32.mrb[0].mxu0
        %v1621 = vpop.f32.mrb[0].mxu0
        %v1622 = vadd.f32 %v1565, %v1621
        %v1623 = vpop.f32.mrb[0].mxu0
        %1624 = vmatprep.mubr.bf16.mxu0 %v469
        %1625 = vmatmul.mubr.bf16.gmra.mrb[0].mxu0 %v468
        %v1626 = vpop.f32.mrb[0].mxu0
        %v1627 = vadd.f32 %v1570, %v1626
        %v1628 = vpop.f32.mrb[0].mxu0
        %v1629 = vpop.f32.mrb[0].mxu0
        %v1630 = vadd.f32 %v1573, %v1629
        %v1631 = vpop.f32.mrb[0].mxu0
        %1632 = vmatprep.mubr.bf16.mxu0 %v475
        %1633 = vmatmul.mubr.bf16.gmra.mrb[0].mxu0 %v474
        %v1634 = vpop.f32.mrb[0].mxu0
        %v1635 = vadd.f32 %v1578, %v1634
        %v1636 = vpop.f32.mrb[0].mxu0
        %v1637 = vpop.f32.mrb[0].mxu0
        %v1638 = vadd.f32 %v1581, %v1637
        %v1639 = vpop.f32.mrb[0].mxu0
        %1640 = vdwg.mxu0
        %1641 = vmatprep.subr.bf16.mxu0 0
        %1642 = vmatpush1.bf16.msra.mxu0 %v1463
        %1643 = vmatprep.subr.bf16.mxu0 0
        %1644 = vmatpush1.bf16.msra.mxu0 %v1464
        %1645 = vmatprep.subr.bf16.mxu0 0
        %1646 = vmatpush1.bf16.msra.mxu0 %v1465
        %1647 = vmatprep.subr.bf16.mxu0 0
        %1648 = vmatpush1.bf16.msra.mxu0 %v1466
        %1649 = vmatprep.subr.bf16.mxu0 0
        %1650 = vmatpush1.bf16.msra.mxu0 %v1467
        %1651 = vmatprep.subr.bf16.mxu0 0
        %1652 = vmatpush1.bf16.msra.mxu0 %v1468
        %1653 = vmatprep.subr.bf16.mxu0 0
        %1654 = vmatpush1.bf16.msra.mxu0 %v1469
        %1655 = vmatprep.subr.bf16.mxu0 0
        %1656 = vmatpush1.bf16.msra.mxu0 %v1470
        %1657 = vmatprep.subr.bf16.mxu0 0
        %1658 = vmatpush1.bf16.msra.mxu0 %v1471
        %1659 = vmatprep.subr.bf16.mxu0 0
        %1660 = vmatpush1.bf16.msra.mxu0 %v1472
        %1661 = vmatprep.subr.bf16.mxu0 0
        %1662 = vmatpush1.bf16.msra.mxu0 %v1473
        %1663 = vmatprep.subr.bf16.mxu0 0
        %1664 = vmatpush1.bf16.msra.mxu0 %v1474
        %1665 = vmatprep.subr.bf16.mxu0 0
        %1666 = vmatpush1.bf16.msra.mxu0 %v1475
        %1667 = vmatprep.subr.bf16.mxu0 0
        %1668 = vmatpush1.bf16.msra.mxu0 %v1476
        %1669 = vmatprep.subr.bf16.mxu0 0
        %1670 = vmatpush1.bf16.msra.mxu0 %v1477
        %1671 = vmatprep.subr.bf16.mxu0 0
        %1672 = vmatpush1.bf16.msra.mxu0 %v1478
        %1673 = vmatprep.mubr.bf16.mxu0 %v465
        %1674 = vmatmul.mubr.bf16.gmra.mrb[0].mxu0 %v464
        %v1675 = vpop.f32.mrb[0].mxu0
        %v1676 = vadd.f32 %v1619, %v1675
        %v1677 = vpop.f32.mrb[0].mxu0
        %v1678 = vpop.f32.mrb[0].mxu0
        %v1679 = vadd.f32 %v1622, %v1678
        %v1680 = vpop.f32.mrb[0].mxu0
        %1681 = vmatprep.mubr.bf16.mxu0 %v471
        %1682 = vmatmul.mubr.bf16.gmra.mrb[0].mxu0 %v470
        %v1683 = vpop.f32.mrb[0].mxu0
        %v1684 = vadd.f32 %v1627, %v1683
        %v1685 = vpop.f32.mrb[0].mxu0
        %v1686 = vpop.f32.mrb[0].mxu0
        %v1687 = vadd.f32 %v1630, %v1686
        %v1688 = vpop.f32.mrb[0].mxu0
        %1689 = vmatprep.mubr.bf16.mxu0 %v477
        %1690 = vmatmul.mubr.bf16.gmra.mrb[0].mxu0 %v476
        %v1691 = vpop.f32.mrb[0].mxu0
        %v1692 = vadd.f32 %v1635, %v1691
        %v1693 = vpop.f32.mrb[0].mxu0
        %v1694 = vpop.f32.mrb[0].mxu0
        %v1695 = vadd.f32 %v1638, %v1694
        %v1696 = vpop.f32.mrb[0].mxu0
        %1697 = vdwg.mxu0
        %v1698 = vld [vmem:[#allocation2 + $0x90] sm:$0xff]
        %v1699 = vld [vmem:[#allocation2 + $0x98] sm:$0xff]
        %v1700 = vld [vmem:[#allocation2 + $0xa0] sm:$0xff]
        %v1701 = vld [vmem:[#allocation2 + $0xa8] sm:$0xff]
        %v1702 = vld [vmem:[#allocation2 + $0xb0] sm:$0xff]
        %v1703 = vld [vmem:[#allocation2 + $0xb8] sm:$0xff]
        %s1704 = scalar_lea.vmem %s2, 768
        %v1705 = vld [vmem:[%s1704] sm:$0xf]
        %v1706 = vld [vmem:[%s1704 + $0x4] sm:$0xf]
        %v1707 = vld [vmem:[%s1704 + $0x8] sm:$0xf]
        %v1708 = vld [vmem:[%s1704 + $0xc] sm:$0xf]
        %v1709 = vld [vmem:[%s1704 + $0x10] sm:$0xf]
        %v1710 = vld [vmem:[%s1704 + $0x14] sm:$0xf]
        %v1711 = vld [vmem:[%s1704 + $0x18] sm:$0xf]
        %v1712 = vld [vmem:[%s1704 + $0x1c] sm:$0xf]
        %v1713 = vld [vmem:[%s1704 + $0x20] sm:$0xf]
        %v1714 = vld [vmem:[%s1704 + $0x24] sm:$0xf]
        %v1715 = vld [vmem:[%s1704 + $0x28] sm:$0xf]
        %v1716 = vld [vmem:[%s1704 + $0x2c] sm:$0xf]
        %v1717 = vld [vmem:[%s1704 + $0x30] sm:$0xf]
        %v1718 = vld [vmem:[%s1704 + $0x34] sm:$0xf]
        %v1719 = vld [vmem:[%s1704 + $0x38] sm:$0xf]
        %v1720 = vld [vmem:[%s1704 + $0x3c] sm:$0xf]
        %v1721 = vld [vmem:[%s1704 + $0x40] sm:$0xf]
        %v1722 = vld [vmem:[%s1704 + $0x44] sm:$0xf]
        %v1723 = vld [vmem:[%s1704 + $0x48] sm:$0xf]
        %v1724 = vld [vmem:[%s1704 + $0x4c] sm:$0xf]
        %v1725 = vld [vmem:[%s1704 + $0x50] sm:$0xf]
        %v1726 = vld [vmem:[%s1704 + $0x54] sm:$0xf]
        %v1727 = vld [vmem:[%s1704 + $0x58] sm:$0xf]
        %v1728 = vld [vmem:[%s1704 + $0x5c] sm:$0xf]
        %v1729 = vld [vmem:[%s1704 + $0x60] sm:$0xf]
        %v1730 = vld [vmem:[%s1704 + $0x64] sm:$0xf]
        %v1731 = vld [vmem:[%s1704 + $0x68] sm:$0xf]
        %v1732 = vld [vmem:[%s1704 + $0x6c] sm:$0xf]
        %v1733 = vld [vmem:[%s1704 + $0x70] sm:$0xf]
        %v1734 = vld [vmem:[%s1704 + $0x74] sm:$0xf]
        %v1735 = vld [vmem:[%s1704 + $0x78] sm:$0xf]
        %v1736 = vld [vmem:[%s1704 + $0x7c] sm:$0xf]
        %v1737 = vld [vmem:[%s1704 + $0x80] sm:$0xf]
        %v1738 = vld [vmem:[%s1704 + $0x84] sm:$0xf]
        %v1739 = vld [vmem:[%s1704 + $0x88] sm:$0xf]
        %v1740 = vld [vmem:[%s1704 + $0x8c] sm:$0xf]
        %v1741 = vld [vmem:[%s1704 + $0x90] sm:$0xf]
        %v1742 = vld [vmem:[%s1704 + $0x94] sm:$0xf]
        %v1743 = vld [vmem:[%s1704 + $0x98] sm:$0xf]
        %v1744 = vld [vmem:[%s1704 + $0x9c] sm:$0xf]
        %v1745 = vld [vmem:[%s1704 + $0xa0] sm:$0xf]
        %v1746 = vld [vmem:[%s1704 + $0xa4] sm:$0xf]
        %v1747 = vld [vmem:[%s1704 + $0xa8] sm:$0xf]
        %v1748 = vld [vmem:[%s1704 + $0xac] sm:$0xf]
        %v1749 = vld [vmem:[%s1704 + $0xb0] sm:$0xf]
        %v1750 = vld [vmem:[%s1704 + $0xb4] sm:$0xf]
        %v1751 = vld [vmem:[%s1704 + $0xb8] sm:$0xf]
        %v1752 = vld [vmem:[%s1704 + $0xbc] sm:$0xf]
        %v1753 = vld [vmem:[%s1704 + $0xc0] sm:$0xf]
        %v1754 = vld [vmem:[%s1704 + $0xc4] sm:$0xf]
        %v1755 = vld [vmem:[%s1704 + $0xc8] sm:$0xf]
        %v1756 = vld [vmem:[%s1704 + $0xcc] sm:$0xf]
        %v1757 = vld [vmem:[%s1704 + $0xd0] sm:$0xf]
        %v1758 = vld [vmem:[%s1704 + $0xd4] sm:$0xf]
        %v1759 = vld [vmem:[%s1704 + $0xd8] sm:$0xf]
        %v1760 = vld [vmem:[%s1704 + $0xdc] sm:$0xf]
        %v1761 = vld [vmem:[%s1704 + $0xe0] sm:$0xf]
        %v1762 = vld [vmem:[%s1704 + $0xe4] sm:$0xf]
        %v1763 = vld [vmem:[%s1704 + $0xe8] sm:$0xf]
        %v1764 = vld [vmem:[%s1704 + $0xec] sm:$0xf]
        %v1765 = vld [vmem:[%s1704 + $0xf0] sm:$0xf]
        %v1766 = vld [vmem:[%s1704 + $0xf4] sm:$0xf]
        %v1767 = vld [vmem:[%s1704 + $0xf8] sm:$0xf]
        %v1768 = vld [vmem:[%s1704 + $0xfc] sm:$0xf]
        %v1769 = vld [vmem:[%s1704 + $0x100] sm:$0xf]
        %v1770 = vld [vmem:[%s1704 + $0x104] sm:$0xf]
        %v1771 = vld [vmem:[%s1704 + $0x108] sm:$0xf]
        %v1772 = vld [vmem:[%s1704 + $0x10c] sm:$0xf]
        %v1773 = vld [vmem:[%s1704 + $0x110] sm:$0xf]
        %v1774 = vld [vmem:[%s1704 + $0x114] sm:$0xf]
        %v1775 = vld [vmem:[%s1704 + $0x118] sm:$0xf]
        %v1776 = vld [vmem:[%s1704 + $0x11c] sm:$0xf]
        %v1777 = vld [vmem:[%s1704 + $0x120] sm:$0xf]
        %v1778 = vld [vmem:[%s1704 + $0x124] sm:$0xf]
        %v1779 = vld [vmem:[%s1704 + $0x128] sm:$0xf]
        %v1780 = vld [vmem:[%s1704 + $0x12c] sm:$0xf]
        %v1781 = vld [vmem:[%s1704 + $0x130] sm:$0xf]
        %v1782 = vld [vmem:[%s1704 + $0x134] sm:$0xf]
        %v1783 = vld [vmem:[%s1704 + $0x138] sm:$0xf]
        %v1784 = vld [vmem:[%s1704 + $0x13c] sm:$0xf]
        %v1785 = vld [vmem:[%s1704 + $0x140] sm:$0xf]
        %v1786 = vld [vmem:[%s1704 + $0x144] sm:$0xf]
        %v1787 = vld [vmem:[%s1704 + $0x148] sm:$0xf]
        %v1788 = vld [vmem:[%s1704 + $0x14c] sm:$0xf]
        %v1789 = vld [vmem:[%s1704 + $0x150] sm:$0xf]
        %v1790 = vld [vmem:[%s1704 + $0x154] sm:$0xf]
        %v1791 = vld [vmem:[%s1704 + $0x158] sm:$0xf]
        %v1792 = vld [vmem:[%s1704 + $0x15c] sm:$0xf]
        %v1793 = vld [vmem:[%s1704 + $0x160] sm:$0xf]
        %v1794 = vld [vmem:[%s1704 + $0x164] sm:$0xf]
        %v1795 = vld [vmem:[%s1704 + $0x168] sm:$0xf]
        %v1796 = vld [vmem:[%s1704 + $0x16c] sm:$0xf]
        %v1797 = vld [vmem:[%s1704 + $0x170] sm:$0xf]
        %v1798 = vld [vmem:[%s1704 + $0x174] sm:$0xf]
        %v1799 = vld [vmem:[%s1704 + $0x178] sm:$0xf]
        %v1800 = vld [vmem:[%s1704 + $0x17c] sm:$0xf]
        %v1897 = vunpack.c.l.b16 %v1705
        %v1898 = vunpack.c.l.b16 %v1706
        %v1899 = vunpack.c.l.b16 %v1707
        %v1900 = vunpack.c.l.b16 %v1708
        %v1901 = vunpack.c.l.b16 %v1709
        %v1902 = vunpack.c.l.b16 %v1710
        %v1903 = vunpack.c.l.b16 %v1711
        %v1904 = vunpack.c.l.b16 %v1712
        %v1905 = vunpack.c.l.b16 %v1713
        %v1906 = vunpack.c.l.b16 %v1714
        %v1907 = vunpack.c.l.b16 %v1715
        %v1908 = vunpack.c.l.b16 %v1716
        %v1909 = vunpack.c.l.b16 %v1717
        %v1910 = vunpack.c.l.b16 %v1718
        %v1911 = vunpack.c.l.b16 %v1719
        %v1912 = vunpack.c.l.b16 %v1720
        %v1913 = vunpack.c.l.b16 %v1721
        %v1914 = vunpack.c.l.b16 %v1722
        %v1915 = vunpack.c.l.b16 %v1723
        %v1916 = vunpack.c.l.b16 %v1724
        %v1917 = vunpack.c.l.b16 %v1725
        %v1918 = vunpack.c.l.b16 %v1726
        %v1919 = vunpack.c.l.b16 %v1727
        %v1920 = vunpack.c.l.b16 %v1728
        %v1921 = vunpack.c.l.b16 %v1729
        %v1922 = vunpack.c.l.b16 %v1730
        %v1923 = vunpack.c.l.b16 %v1731
        %v1924 = vunpack.c.l.b16 %v1732
        %v1925 = vunpack.c.l.b16 %v1733
        %v1926 = vunpack.c.l.b16 %v1734
        %v1927 = vunpack.c.l.b16 %v1735
        %v1928 = vunpack.c.l.b16 %v1736
        %v1929 = vunpack.c.l.b16 %v1737
        %v1930 = vunpack.c.l.b16 %v1738
        %v1931 = vunpack.c.l.b16 %v1739
        %v1932 = vunpack.c.l.b16 %v1740
        %v1933 = vunpack.c.l.b16 %v1741
        %v1934 = vunpack.c.l.b16 %v1742
        %v1935 = vunpack.c.l.b16 %v1743
        %v1936 = vunpack.c.l.b16 %v1744
        %v1937 = vunpack.c.l.b16 %v1745
        %v1938 = vunpack.c.l.b16 %v1746
        %v1939 = vunpack.c.l.b16 %v1747
        %v1940 = vunpack.c.l.b16 %v1748
        %v1941 = vunpack.c.l.b16 %v1749
        %v1942 = vunpack.c.l.b16 %v1750
        %v1943 = vunpack.c.l.b16 %v1751
        %v1944 = vunpack.c.l.b16 %v1752
        %v1945 = vunpack.c.l.b16 %v1753
        %v1946 = vunpack.c.l.b16 %v1754
        %v1947 = vunpack.c.l.b16 %v1755
        %v1948 = vunpack.c.l.b16 %v1756
        %v1949 = vunpack.c.l.b16 %v1757
        %v1950 = vunpack.c.l.b16 %v1758
        %v1951 = vunpack.c.l.b16 %v1759
        %v1952 = vunpack.c.l.b16 %v1760
        %v1953 = vunpack.c.l.b16 %v1761
        %v1954 = vunpack.c.l.b16 %v1762
        %v1955 = vunpack.c.l.b16 %v1763
        %v1956 = vunpack.c.l.b16 %v1764
        %v1957 = vunpack.c.l.b16 %v1765
        %v1958 = vunpack.c.l.b16 %v1766
        %v1959 = vunpack.c.l.b16 %v1767
        %v1960 = vunpack.c.l.b16 %v1768
        %v1961 = vunpack.c.l.b16 %v1769
        %v1962 = vunpack.c.l.b16 %v1770
        %v1963 = vunpack.c.l.b16 %v1771
        %v1964 = vunpack.c.l.b16 %v1772
        %v1965 = vunpack.c.l.b16 %v1773
        %v1966 = vunpack.c.l.b16 %v1774
        %v1967 = vunpack.c.l.b16 %v1775
        %v1968 = vunpack.c.l.b16 %v1776
        %v1969 = vunpack.c.l.b16 %v1777
        %v1970 = vunpack.c.l.b16 %v1778
        %v1971 = vunpack.c.l.b16 %v1779
        %v1972 = vunpack.c.l.b16 %v1780
        %v1973 = vunpack.c.l.b16 %v1781
        %v1974 = vunpack.c.l.b16 %v1782
        %v1975 = vunpack.c.l.b16 %v1783
        %v1976 = vunpack.c.l.b16 %v1784
        %v1977 = vunpack.c.l.b16 %v1785
        %v1978 = vunpack.c.l.b16 %v1786
        %v1979 = vunpack.c.l.b16 %v1787
        %v1980 = vunpack.c.l.b16 %v1788
        %v1981 = vunpack.c.l.b16 %v1789
        %v1982 = vunpack.c.l.b16 %v1790
        %v1983 = vunpack.c.l.b16 %v1791
        %v1984 = vunpack.c.l.b16 %v1792
        %v1985 = vunpack.c.l.b16 %v1793
        %v1986 = vunpack.c.l.b16 %v1794
        %v1987 = vunpack.c.l.b16 %v1795
        %v1988 = vunpack.c.l.b16 %v1796
        %v1989 = vunpack.c.l.b16 %v1797
        %v1990 = vunpack.c.l.b16 %v1798
        %v1991 = vunpack.c.l.b16 %v1799
        %v1992 = vunpack.c.l.b16 %v1800
        %v1993 = vpack.c.b16 %v1898, %v1897
        %v1994 = vpack.c.b16 %v1900, %v1899
        %v1995 = vpack.c.b16 %v1902, %v1901
        %v1996 = vpack.c.b16 %v1904, %v1903
        %v1997 = vpack.c.b16 %v1906, %v1905
        %v1998 = vpack.c.b16 %v1908, %v1907
        %v1999 = vpack.c.b16 %v1910, %v1909
        %v2000 = vpack.c.b16 %v1912, %v1911
        %v2001 = vpack.c.b16 %v1914, %v1913
        %v2002 = vpack.c.b16 %v1916, %v1915
        %v2003 = vpack.c.b16 %v1918, %v1917
        %v2004 = vpack.c.b16 %v1920, %v1919
        %v2005 = vpack.c.b16 %v1922, %v1921
        %v2006 = vpack.c.b16 %v1924, %v1923
        %v2007 = vpack.c.b16 %v1926, %v1925
        %v2008 = vpack.c.b16 %v1928, %v1927
        %v2009 = vpack.c.b16 %v1930, %v1929
        %v2010 = vpack.c.b16 %v1932, %v1931
        %v2011 = vpack.c.b16 %v1934, %v1933
        %v2012 = vpack.c.b16 %v1936, %v1935
        %v2013 = vpack.c.b16 %v1938, %v1937
        %v2014 = vpack.c.b16 %v1940, %v1939
        %v2015 = vpack.c.b16 %v1942, %v1941
        %v2016 = vpack.c.b16 %v1944, %v1943
        %v2017 = vpack.c.b16 %v1946, %v1945
        %v2018 = vpack.c.b16 %v1948, %v1947
        %v2019 = vpack.c.b16 %v1950, %v1949
        %v2020 = vpack.c.b16 %v1952, %v1951
        %v2021 = vpack.c.b16 %v1954, %v1953
        %v2022 = vpack.c.b16 %v1956, %v1955
        %v2023 = vpack.c.b16 %v1958, %v1957
        %v2024 = vpack.c.b16 %v1960, %v1959
        %v2025 = vpack.c.b16 %v1962, %v1961
        %v2026 = vpack.c.b16 %v1964, %v1963
        %v2027 = vpack.c.b16 %v1966, %v1965
        %v2028 = vpack.c.b16 %v1968, %v1967
        %v2029 = vpack.c.b16 %v1970, %v1969
        %v2030 = vpack.c.b16 %v1972, %v1971
        %v2031 = vpack.c.b16 %v1974, %v1973
        %v2032 = vpack.c.b16 %v1976, %v1975
        %v2033 = vpack.c.b16 %v1978, %v1977
        %v2034 = vpack.c.b16 %v1980, %v1979
        %v2035 = vpack.c.b16 %v1982, %v1981
        %v2036 = vpack.c.b16 %v1984, %v1983
        %v2037 = vpack.c.b16 %v1986, %v1985
        %v2038 = vpack.c.b16 %v1988, %v1987
        %v2039 = vpack.c.b16 %v1990, %v1989
        %v2040 = vpack.c.b16 %v1992, %v1991
        %2089 = vmatprep.subr.bf16.mxu0 0
        %2090 = vmatpush1.bf16.msra.mxu0 %v1993
        %2091 = vmatprep.subr.bf16.mxu0 0
        %2092 = vmatpush1.bf16.msra.mxu0 %v1994
        %2093 = vmatprep.subr.bf16.mxu0 0
        %2094 = vmatpush1.bf16.msra.mxu0 %v1995
        %2095 = vmatprep.subr.bf16.mxu0 0
        %2096 = vmatpush1.bf16.msra.mxu0 %v1996
        %2097 = vmatprep.subr.bf16.mxu0 0
        %2098 = vmatpush1.bf16.msra.mxu0 %v1997
        %2099 = vmatprep.subr.bf16.mxu0 0
        %2100 = vmatpush1.bf16.msra.mxu0 %v1998
        %2101 = vmatprep.subr.bf16.mxu0 0
        %2102 = vmatpush1.bf16.msra.mxu0 %v1999
        %2103 = vmatprep.subr.bf16.mxu0 0
        %2104 = vmatpush1.bf16.msra.mxu0 %v2000
        %2105 = vmatprep.subr.bf16.mxu0 0
        %2106 = vmatpush1.bf16.msra.mxu0 %v2001
        %2107 = vmatprep.subr.bf16.mxu0 0
        %2108 = vmatpush1.bf16.msra.mxu0 %v2002
        %2109 = vmatprep.subr.bf16.mxu0 0
        %2110 = vmatpush1.bf16.msra.mxu0 %v2003
        %2111 = vmatprep.subr.bf16.mxu0 0
        %2112 = vmatpush1.bf16.msra.mxu0 %v2004
        %2113 = vmatprep.subr.bf16.mxu0 0
        %2114 = vmatpush1.bf16.msra.mxu0 %v2005
        %2115 = vmatprep.subr.bf16.mxu0 0
        %2116 = vmatpush1.bf16.msra.mxu0 %v2006
        %2117 = vmatprep.subr.bf16.mxu0 0
        %2118 = vmatpush1.bf16.msra.mxu0 %v2007
        %2119 = vmatprep.subr.bf16.mxu0 0
        %2120 = vmatpush1.bf16.msra.mxu0 %v2008
        %2121 = vmatprep.mubr.bf16.mxu0 %v581
        %2122 = vmatmul.mubr.bf16.gmra.mrb[0].mxu0 %v580
        %v2123 = vpop.f32.mrb[0].mxu0
        %v2124 = vadd.f32 0.0, %v2123
        %v2125 = vpop.f32.mrb[0].mxu0
        %v2126 = vpop.f32.mrb[0].mxu0
        %v2127 = vadd.f32 0.0, %v2126
        %v2128 = vpop.f32.mrb[0].mxu0
        %2129 = vmatprep.mubr.bf16.mxu0 %v587
        %2130 = vmatmul.mubr.bf16.gmra.mrb[0].mxu0 %v586
        %v2131 = vpop.f32.mrb[0].mxu0
        %v2132 = vadd.f32 0.0, %v2131
        %v2133 = vpop.f32.mrb[0].mxu0
        %v2134 = vpop.f32.mrb[0].mxu0
        %v2135 = vadd.f32 0.0, %v2134
        %v2136 = vpop.f32.mrb[0].mxu0
        %2137 = vmatprep.mubr.bf16.mxu0 %v1699
        %2138 = vmatmul.mubr.bf16.gmra.mrb[0].mxu0 %v1698
        %v2139 = vpop.f32.mrb[0].mxu0
        %v2140 = vadd.f32 0.0, %v2139
        %v2141 = vpop.f32.mrb[0].mxu0
        %v2142 = vpop.f32.mrb[0].mxu0
        %v2143 = vadd.f32 0.0, %v2142
        %v2144 = vpop.f32.mrb[0].mxu0
        %2145 = vdwg.mxu0
        %2146 = vmatprep.subr.bf16.mxu0 0
        %2147 = vmatpush1.bf16.msra.mxu0 %v2009
        %2148 = vmatprep.subr.bf16.mxu0 0
        %2149 = vmatpush1.bf16.msra.mxu0 %v2010
        %2150 = vmatprep.subr.bf16.mxu0 0
        %2151 = vmatpush1.bf16.msra.mxu0 %v2011
        %2152 = vmatprep.subr.bf16.mxu0 0
        %2153 = vmatpush1.bf16.msra.mxu0 %v2012
        %2154 = vmatprep.subr.bf16.mxu0 0
        %2155 = vmatpush1.bf16.msra.mxu0 %v2013
        %2156 = vmatprep.subr.bf16.mxu0 0
        %2157 = vmatpush1.bf16.msra.mxu0 %v2014
        %2158 = vmatprep.subr.bf16.mxu0 0
        %2159 = vmatpush1.bf16.msra.mxu0 %v2015
        %2160 = vmatprep.subr.bf16.mxu0 0
        %2161 = vmatpush1.bf16.msra.mxu0 %v2016
        %2162 = vmatprep.subr.bf16.mxu0 0
        %2163 = vmatpush1.bf16.msra.mxu0 %v2017
        %2164 = vmatprep.subr.bf16.mxu0 0
        %2165 = vmatpush1.bf16.msra.mxu0 %v2018
        %2166 = vmatprep.subr.bf16.mxu0 0
        %2167 = vmatpush1.bf16.msra.mxu0 %v2019
        %2168 = vmatprep.subr.bf16.mxu0 0
        %2169 = vmatpush1.bf16.msra.mxu0 %v2020
        %2170 = vmatprep.subr.bf16.mxu0 0
        %2171 = vmatpush1.bf16.msra.mxu0 %v2021
        %2172 = vmatprep.subr.bf16.mxu0 0
        %2173 = vmatpush1.bf16.msra.mxu0 %v2022
        %2174 = vmatprep.subr.bf16.mxu0 0
        %2175 = vmatpush1.bf16.msra.mxu0 %v2023
        %2176 = vmatprep.subr.bf16.mxu0 0
        %2177 = vmatpush1.bf16.msra.mxu0 %v2024
        %2178 = vmatprep.mubr.bf16.mxu0 %v583
        %2179 = vmatmul.mubr.bf16.gmra.mrb[0].mxu0 %v582
        %v2180 = vpop.f32.mrb[0].mxu0
        %v2181 = vadd.f32 %v2124, %v2180
        %v2182 = vpop.f32.mrb[0].mxu0
        %v2183 = vpop.f32.mrb[0].mxu0
        %v2184 = vadd.f32 %v2127, %v2183
        %v2185 = vpop.f32.mrb[0].mxu0
        %2186 = vmatprep.mubr.bf16.mxu0 %v589
        %2187 = vmatmul.mubr.bf16.gmra.mrb[0].mxu0 %v588
        %v2188 = vpop.f32.mrb[0].mxu0
        %v2189 = vadd.f32 %v2132, %v2188
        %v2190 = vpop.f32.mrb[0].mxu0
        %v2191 = vpop.f32.mrb[0].mxu0
        %v2192 = vadd.f32 %v2135, %v2191
        %v2193 = vpop.f32.mrb[0].mxu0
        %2194 = vmatprep.mubr.bf16.mxu0 %v1701
        %2195 = vmatmul.mubr.bf16.gmra.mrb[0].mxu0 %v1700
        %v2196 = vpop.f32.mrb[0].mxu0
        %v2197 = vadd.f32 %v2140, %v2196
        %v2198 = vpop.f32.mrb[0].mxu0
        %v2199 = vpop.f32.mrb[0].mxu0
        %v2200 = vadd.f32 %v2143, %v2199
        %v2201 = vpop.f32.mrb[0].mxu0
        %2202 = vdwg.mxu0
        %2203 = vmatprep.subr.bf16.mxu0 0
        %2204 = vmatpush1.bf16.msra.mxu0 %v2025
        %2205 = vmatprep.subr.bf16.mxu0 0
        %2206 = vmatpush1.bf16.msra.mxu0 %v2026
        %2207 = vmatprep.subr.bf16.mxu0 0
        %2208 = vmatpush1.bf16.msra.mxu0 %v2027
        %2209 = vmatprep.subr.bf16.mxu0 0
        %2210 = vmatpush1.bf16.msra.mxu0 %v2028
        %2211 = vmatprep.subr.bf16.mxu0 0
        %2212 = vmatpush1.bf16.msra.mxu0 %v2029
        %2213 = vmatprep.subr.bf16.mxu0 0
        %2214 = vmatpush1.bf16.msra.mxu0 %v2030
        %2215 = vmatprep.subr.bf16.mxu0 0
        %2216 = vmatpush1.bf16.msra.mxu0 %v2031
        %2217 = vmatprep.subr.bf16.mxu0 0
        %2218 = vmatpush1.bf16.msra.mxu0 %v2032
        %2219 = vmatprep.subr.bf16.mxu0 0
        %2220 = vmatpush1.bf16.msra.mxu0 %v2033
        %2221 = vmatprep.subr.bf16.mxu0 0
        %2222 = vmatpush1.bf16.msra.mxu0 %v2034
        %2223 = vmatprep.subr.bf16.mxu0 0
        %2224 = vmatpush1.bf16.msra.mxu0 %v2035
        %2225 = vmatprep.subr.bf16.mxu0 0
        %2226 = vmatpush1.bf16.msra.mxu0 %v2036
        %2227 = vmatprep.subr.bf16.mxu0 0
        %2228 = vmatpush1.bf16.msra.mxu0 %v2037
        %2229 = vmatprep.subr.bf16.mxu0 0
        %2230 = vmatpush1.bf16.msra.mxu0 %v2038
        %2231 = vmatprep.subr.bf16.mxu0 0
        %2232 = vmatpush1.bf16.msra.mxu0 %v2039
        %2233 = vmatprep.subr.bf16.mxu0 0
        %2234 = vmatpush1.bf16.msra.mxu0 %v2040
        %2235 = vmatprep.mubr.bf16.mxu0 %v585
        %2236 = vmatmul.mubr.bf16.gmra.mrb[0].mxu0 %v584
        %v2237 = vpop.f32.mrb[0].mxu0
        %v2238 = vadd.f32 %v2181, %v2237
        %v2239 = vpop.f32.mrb[0].mxu0
        %v2240 = vpop.f32.mrb[0].mxu0
        %v2241 = vadd.f32 %v2184, %v2240
        %v2242 = vpop.f32.mrb[0].mxu0
        %2243 = vmatprep.mubr.bf16.mxu0 %v591
        %2244 = vmatmul.mubr.bf16.gmra.mrb[0].mxu0 %v590
        %v2245 = vpop.f32.mrb[0].mxu0
        %v2246 = vadd.f32 %v2189, %v2245
        %v2247 = vpop.f32.mrb[0].mxu0
        %v2248 = vpop.f32.mrb[0].mxu0
        %v2249 = vadd.f32 %v2192, %v2248
        %v2250 = vpop.f32.mrb[0].mxu0
        %2251 = vmatprep.mubr.bf16.mxu0 %v1703
        %2252 = vmatmul.mubr.bf16.gmra.mrb[0].mxu0 %v1702
        %v2253 = vpop.f32.mrb[0].mxu0
        %v2254 = vadd.f32 %v2197, %v2253
        %v2255 = vpop.f32.mrb[0].mxu0
        %v2256 = vpop.f32.mrb[0].mxu0
        %v2257 = vadd.f32 %v2200, %v2256
        %v2258 = vpop.f32.mrb[0].mxu0
        %2259 = vdwg.mxu0
        %v2260 = vadd.f32 %v1676, %v2238
        %v2261 = vadd.f32 %v1679, %v2241
        %v2262 = vadd.f32 %v1684, %v2246
        %v2263 = vadd.f32 %v1687, %v2249
        %v2264 = vadd.f32 %v1692, %v2254
        %v2265 = vadd.f32 %v1695, %v2257
        %v2266 = vld [vmem:[#allocation3] sm:$0x1]
        %v2268 = vlaneseq
        %v2269 = vshrl.u32 %v2268, 7
        %v2270 = vsub.s32 0, %v2269
        %v2271 = vrot.slane %v2266, %v2270
        %v2273 = vadd.f32 %v2260, %v2271
        %v2274 = vadd.f32 %v2261, %v2271
        %v2275 = vadd.f32 %v2262, %v2271
        %v2276 = vadd.f32 %v2263, %v2271
        %v2277 = vadd.f32 %v2264, %v2271
        %v2278 = vadd.f32 %v2265, %v2271
        %2279 = vst [vmem:[%s230] sm:$0xff] %v2273
        %2280 = vst [vmem:[%s230 + $0x8] sm:$0xff] %v2274
        %2281 = vst [vmem:[%s230 + $0x10] sm:$0xff] %v2275
        %2282 = vst [vmem:[%s230 + $0x18] sm:$0xff] %v2276
        %2283 = vst [vmem:[%s230 + $0x20] sm:$0xff] %v2277
        %2284 = vst [vmem:[%s230 + $0x28] sm:$0xff] %v2278
        %p2285 = scmp.lt.s32.totalorder %s16, 1
        %s2286 = scalar_select %p2285, %s16, 1
        %s2287 = smul.addr %s2286, 6
        %s2288 = smul.addr %s2287, 8
        %s2289 = scalar_lea.vmem %s4, %s2288
        // Predicated region
        $region41: #{patch_embed_event.1} parent=35 // pred_check
          %p2290 = pneg %p128
        $region42: #{patch_embed_event.1} parent=35 // pred_check_branch
          %2292 = sbr.rel (%p2290) target = $region44
        $region43: #{patch_embed_event.1} parent=35 // pred_region
          _
        $region44: #{patch_embed_event.1} parent=35 // pred_fallthru
          _
      $region36: #{patch_embed_event.1} parent=5 // pred_fallthru
        _
      %p2293 = scmp.le.s32.totalorder 2, %s11
      // Predicated region
      $region45: #{patch_embed_event.1} parent=5 // pred_check
        %p2294 = pneg %p2293
      $region46: #{patch_embed_event.1} parent=5 // pred_check_branch
        %2296 = sbr.rel (%p2294) target = $region48
      $region47: #{patch_embed_event.1} parent=5 // pred_region
        %s2297 = ssub.s32 %s11, 2
        // Predicated region
        $region49: #{patch_embed_event.1} parent=47 // pred_check
          %p2298 = pneg %p134
        $region50: #{patch_embed_event.1} parent=47 // pred_check_branch
          %2300 = sbr.rel (%p2298) target = $region52
        $region51: #{patch_embed_event.1} parent=47 // pred_region
          %p2301 = scmp.lt.s32.totalorder %s17, 1
          %s2302 = scalar_select %p2301, %s17, 1
          %s2303 = smul.addr %s2302, 6
          %s2304 = smul.addr %s2303, 8
          %s2305 = scalar_lea.vmem %s4, %s2304
        $region52: #{patch_embed_event.1} parent=47 // pred_fallthru
          _
      $region48: #{patch_embed_event.1} parent=5 // pred_fallthru
        _
    $region6: #{patch_embed_event.1} parent=1 // loop_footer
      %s15 = sadd.s32 1, %s11
    $region7: #{patch_embed_event.1} parent=1 // loop_footer_branch
      %10 = sbr.rel target = $region3
    $region8: #{patch_embed_event.1} parent=1 // loop_exit
      _
    %2306 = vsyncpa [#allocation4], 1
    %s2307 = scalar_lea.sflag [#allocation4], 1
    %2308 = vsyncpa %s2307, 1

</llo_original>
